<compile_context>
chip_gen: v7x
topology: tpu7x:2x2x1
jax: 0.10.0
libtpu: 0.0.40
codegen_flags: <defaults>
</compile_context>

<pallas_src>
import functools

import jax
import jax.numpy as jnp
from jax.experimental import pallas as pl
from jax.experimental.pallas import tpu as pltpu  # noqa: F401  (TPU backend)


def _round_up(n, m):
    return ((n + m - 1) // m) * m


# ----------------------------------------------------------------------------
# Fused Pallas kernel: encode -> reparam -> decode -> recon + loss
# ----------------------------------------------------------------------------
def _vae_fused_kernel(x_ref, eps_ref,
                      w_enc_ref, w_st_ref, w_dec_ref, w_out_ref,
                      b_all_ref,
                      recon_ref, stats_ref,
                      *, latent_dim):
    hidden_dim = w_enc_ref.shape[1]
    stats_dim = w_st_ref.shape[1]          # lane-padded width (128)
    in_dim = w_out_ref.shape[1]

    x = x_ref[...]                          # [B, D]  f32 (B need not be 8-aligned)

    # Packed biases: row 0 = b_enc, 1 = b_stats, 2 = b_dec, 3 = b_out.
    b_enc = b_all_ref[0:1, :hidden_dim]
    b_st = b_all_ref[1:2, :stats_dim]
    b_dec = b_all_ref[2:3, :hidden_dim]
    b_out = b_all_ref[3:4, :in_dim]

    # ---- encoder: h = relu(x @ W_enc + b_enc)   (bf16 MXU, f32 accumulate)
    h = jnp.dot(x.astype(jnp.bfloat16), w_enc_ref[...],
                preferred_element_type=jnp.float32) + b_enc
    h = jnp.maximum(h, 0.0)

    # ---- merged mu/logvar projection (lane-padded to 128 columns).
    # Store immediately: ends the stats live range before the loss epilogue.
    stats = jnp.dot(h.astype(jnp.bfloat16), w_st_ref[...],
                    preferred_element_type=jnp.float32) + b_st
    stats_ref[...] = stats

    mu = stats[:, :latent_dim]
    logvar = stats[:, latent_dim:2 * latent_dim]

    # ---- reparameterize: z = mu + std * eps  (std reused as var = std*std)
    std = jnp.exp(0.5 * logvar)
    z = mu + std * eps_ref[...]

    # ---- decoder
    hd = jnp.dot(z.astype(jnp.bfloat16), w_dec_ref[...],
                 preferred_element_type=jnp.float32) + b_dec
    hd = jnp.maximum(hd, 0.0)
    logits = jnp.dot(hd.astype(jnp.bfloat16), w_out_ref[...],
                     preferred_element_type=jnp.float32) + b_out
    recon = jax.nn.sigmoid(logits)
    recon_ref[...] = recon                  # store before the loss block

    # ---- fused loss: stable BCE-with-logits + KL (SUM reduction).
    # Mosaic masks the internally padded sublanes in these reductions, so the
    # unpadded batch needs no explicit row mask.
    bce_elt = (jnp.maximum(logits, 0.0) - logits * x
               + jnp.log(1.0 + jnp.exp(-jnp.abs(logits))))          # [B, D]
    kld_elt = -0.5 * (1.0 + logvar - mu * mu - std * std)           # [B, L]
    per_row = (jnp.sum(bce_elt, axis=1, keepdims=True)
               + jnp.sum(kld_elt, axis=1, keepdims=True))           # [B, 1]
    total = jnp.sum(per_row, axis=0, keepdims=True)                 # [1, 1]

    # Fold the scalar loss into a spare lane of the (already lane-dense)
    # stats output: lane 2*latent_dim of row 0.
    stats_ref[0:1, 2 * latent_dim:2 * latent_dim + 1] = total


# ----------------------------------------------------------------------------
# Forward wrapper: single pallas_call, no host-side padding or masking.
# ----------------------------------------------------------------------------
@jax.jit
def vae_forward(x_nchw, eps, params):
    B, C, H, W = x_nchw.shape
    D = C * H * W
    latent = eps.shape[1]
    Ns = params["w_stats"].shape[1]       # lane-padded stats width (128)

    x_flat = x_nchw.reshape(B, D).astype(jnp.float32)

    kernel = functools.partial(_vae_fused_kernel, latent_dim=latent)
    recon_flat, stats = pl.pallas_call(
        kernel,
        out_shape=(
            jax.ShapeDtypeStruct((B, D), jnp.float32),    # recon
            jax.ShapeDtypeStruct((B, Ns), jnp.float32),   # [mu | logvar | loss | pad]
        ),
        # No grid / BlockSpecs: single program, every operand fully VMEM-
        # resident (~0.7 MiB total), no HBM round-trips between stages.
    )(x_flat, eps.astype(jnp.float32),
      params["w_enc"], params["w_stats"], params["w_dec"], params["w_out"],
      params["b_all"])

    recon = recon_flat.reshape(B, C, H, W)
    mu = stats[:, :latent]
    logvar = stats[:, latent:2 * latent]
    loss = stats[0, 2 * latent]
    return recon, mu, logvar, loss


# ----------------------------------------------------------------------------
# Model glue (parameter construction in plain JAX; forward is the fused kernel)
# ----------------------------------------------------------------------------
class PallasVAE:
    def __init__(self, in_dim, hidden_dim, latent_dim, key):
        ks = jax.random.split(key, 5)
        s = 0.02
        self.latent_dim = latent_dim

        def w(k, shape):
            return (s * jax.random.normal(k, shape)).astype(jnp.float32)

        w_enc = w(ks[0], (in_dim, hidden_dim))
        w_mu = w(ks[1], (hidden_dim, latent_dim))
        w_lv = w(ks[2], (hidden_dim, latent_dim))
        w_dec = w(ks[3], (latent_dim, hidden_dim))
        w_out = w(ks[4], (hidden_dim, in_dim))

        # Merge mu/logvar weights, lane-pad to a multiple of 128 columns.
        ns = _round_up(2 * latent_dim, 128)
        w_stats = jnp.zeros((hidden_dim, ns), jnp.float32)
        w_stats = w_stats.at[:, :latent_dim].set(w_mu)
        w_stats = w_stats.at[:, latent_dim:2 * latent_dim].set(w_lv)

        # All four biases packed into one (8, in_dim) f32 operand (rows:
        # 0=b_enc, 1=b_stats, 2=b_dec, 3=b_out; all zero-initialized here).
        b_all = jnp.zeros((8, in_dim), jnp.float32)

        self.params = {
            # MXU operands in bf16 (f32 accumulation inside the kernel).
            "w_enc": w_enc.astype(jnp.bfloat16),
            "w_stats": w_stats.astype(jnp.bfloat16),
            "w_dec": w_dec.astype(jnp.bfloat16),
            "w_out": w_out.astype(jnp.bfloat16),
            # Packed biases stay f32.
            "b_all": b_all,
        }

    # encode/decode/reparameterize/loss are fused inside the single Pallas
    # kernel; forward returns everything in one shot.
    def forward(self, x_nchw, eps):
        return vae_forward(x_nchw, eps, self.params)


# ----------------------------------------------------------------------------
# Main
# ----------------------------------------------------------------------------
if __name__ == "__main__":
    key = jax.random.PRNGKey(0)
    k_x, k_eps, k_params = jax.random.split(key, 3)

    B, C, H, W = 2, 4, 16, 16
    in_dim = C * H * W          # 1024
    hidden_dim = 128
    latent_dim = 32

    x = jax.random.uniform(k_x, (B, C, H, W), dtype=jnp.float32)
    eps = jax.random.normal(k_eps, (B, latent_dim), dtype=jnp.float32)

    model = PallasVAE(in_dim, hidden_dim, latent_dim, k_params)

    recon, mu, logvar, loss = model.forward(x, eps)
    jax.block_until_ready((recon, mu, logvar, loss))

    assert recon.shape == (B, C, H, W)
    assert mu.shape == (B, latent_dim)
    assert logvar.shape == (B, latent_dim)
    assert bool(jnp.all(jnp.isfinite(recon)))
    assert bool(jnp.all(recon >= 0.0)) and bool(jnp.all(recon <= 1.0))
    assert bool(jnp.all(jnp.isfinite(mu)))
    assert bool(jnp.all(jnp.isfinite(logvar)))
    assert bool(jnp.isfinite(loss))

    print("KERNEL_OK")
</pallas_src>

<mosaic_0001>
module attributes {stable_mosaic.version = 11 : i64} {
  func.func @_vae_fused_kernel(%arg0: memref<2x1024xf32, #tpu.memory_space<vmem>>, %arg1: memref<2x32xf32, #tpu.memory_space<vmem>>, %arg2: memref<1024x128xbf16, #tpu.memory_space<vmem>>, %arg3: memref<128x128xbf16, #tpu.memory_space<vmem>>, %arg4: memref<32x128xbf16, #tpu.memory_space<vmem>>, %arg5: memref<128x1024xbf16, #tpu.memory_space<vmem>>, %arg6: memref<8x1024xf32, #tpu.memory_space<vmem>>, %arg7: memref<2x1024xf32, #tpu.memory_space<vmem>>, %arg8: memref<2x128xf32, #tpu.memory_space<vmem>>) attributes {dimension_semantics = [], scalar_prefetch = 0 : i64, scratch_operands = 0 : i64, tpu.core_type = #tpu.core_type<tc>} {
    %c0 = arith.constant 0 : index
    %c0_0 = arith.constant 0 : index
    %0 = vector.load %arg0[%c0, %c0_0] : memref<2x1024xf32, #tpu.memory_space<vmem>>, vector<2x1024xf32>
    %c0_1 = arith.constant 0 : index
    %c0_2 = arith.constant 0 : index
    %1 = vector.load %arg6[%c0_1, %c0_2] : memref<8x1024xf32, #tpu.memory_space<vmem>>, vector<1x128xf32>
    %c1 = arith.constant 1 : index
    %c0_3 = arith.constant 0 : index
    %2 = vector.load %arg6[%c1, %c0_3] : memref<8x1024xf32, #tpu.memory_space<vmem>>, vector<1x128xf32>
    %c2 = arith.constant 2 : index
    %c0_4 = arith.constant 0 : index
    %3 = vector.load %arg6[%c2, %c0_4] : memref<8x1024xf32, #tpu.memory_space<vmem>>, vector<1x128xf32>
    %c3 = arith.constant 3 : index
    %c0_5 = arith.constant 0 : index
    %4 = vector.load %arg6[%c3, %c0_5] : memref<8x1024xf32, #tpu.memory_space<vmem>>, vector<1x1024xf32>
    %5 = arith.truncf %0 : vector<2x1024xf32> to vector<2x1024xbf16>
    %c0_6 = arith.constant 0 : index
    %c0_7 = arith.constant 0 : index
    %6 = vector.load %arg2[%c0_6, %c0_7] : memref<1024x128xbf16, #tpu.memory_space<vmem>>, vector<1024x128xbf16>
    %cst = arith.constant dense<0.000000e+00> : vector<2x128xf32>
    %7 = tpu.matmul %5, %6, %cst {dimension_numbers = #tpu.dot_dimension_numbers<[1], [0], [0], [1], [0, 0, 1, 1], [], []>} : vector<2x1024xbf16>, vector<1024x128xbf16>, vector<2x128xf32> -> vector<2x128xf32>
    %8 = vector.broadcast %1 : vector<1x128xf32> to vector<2x128xf32>
    %9 = arith.addf %7, %8 : vector<2x128xf32>
    %cst_8 = arith.constant 0.000000e+00 : f32
    %10 = vector.broadcast %cst_8 : f32 to vector<2x128xf32>
    %11 = arith.maximumf %9, %10 : vector<2x128xf32>
    %12 = arith.truncf %11 : vector<2x128xf32> to vector<2x128xbf16>
    %c0_9 = arith.constant 0 : index
    %c0_10 = arith.constant 0 : index
    %13 = vector.load %arg3[%c0_9, %c0_10] : memref<128x128xbf16, #tpu.memory_space<vmem>>, vector<128x128xbf16>
    %cst_11 = arith.constant dense<0.000000e+00> : vector<2x128xf32>
    %14 = tpu.matmul %12, %13, %cst_11 {dimension_numbers = #tpu.dot_dimension_numbers<[1], [0], [0], [1], [0, 0, 1, 1], [], []>} : vector<2x128xbf16>, vector<128x128xbf16>, vector<2x128xf32> -> vector<2x128xf32>
    %15 = vector.broadcast %2 : vector<1x128xf32> to vector<2x128xf32>
    %16 = arith.addf %14, %15 : vector<2x128xf32>
    %c0_12 = arith.constant 0 : index
    %c0_13 = arith.constant 0 : index
    %17 = vector.load %arg8[%c0_12, %c0_13] : memref<2x128xf32, #tpu.memory_space<vmem>>, vector<2x128xf32>
    tpu.vector_store %arg8[%c0_12, %c0_13], %16 {strides = array<i32>} : memref<2x128xf32, #tpu.memory_space<vmem>>, vector<2x128xf32>,
    %18 = vector.extract_strided_slice %16 {offsets = [0, 0], sizes = [2, 32], strides = [1, 1]} : vector<2x128xf32> to vector<2x32xf32>
    %19 = vector.extract_strided_slice %16 {offsets = [0, 32], sizes = [2, 32], strides = [1, 1]} : vector<2x128xf32> to vector<2x32xf32>
    %cst_14 = arith.constant 5.000000e-01 : f32
    %20 = vector.broadcast %cst_14 : f32 to vector<2x32xf32>
    %21 = arith.mulf %20, %19 : vector<2x32xf32>
    %22 = math.exp %21 : vector<2x32xf32>
    %c0_15 = arith.constant 0 : index
    %c0_16 = arith.constant 0 : index
    %23 = vector.load %arg1[%c0_15, %c0_16] : memref<2x32xf32, #tpu.memory_space<vmem>>, vector<2x32xf32>
    %24 = arith.mulf %22, %23 : vector<2x32xf32>
    %25 = arith.addf %18, %24 : vector<2x32xf32>
    %26 = arith.truncf %25 : vector<2x32xf32> to vector<2x32xbf16>
    %c0_17 = arith.constant 0 : index
    %c0_18 = arith.constant 0 : index
    %27 = vector.load %arg4[%c0_17, %c0_18] : memref<32x128xbf16, #tpu.memory_space<vmem>>, vector<32x128xbf16>
    %cst_19 = arith.constant dense<0.000000e+00> : vector<2x128xf32>
    %28 = tpu.matmul %26, %27, %cst_19 {dimension_numbers = #tpu.dot_dimension_numbers<[1], [0], [0], [1], [0, 0, 1, 1], [], []>} : vector<2x32xbf16>, vector<32x128xbf16>, vector<2x128xf32> -> vector<2x128xf32>
    %29 = vector.broadcast %3 : vector<1x128xf32> to vector<2x128xf32>
    %30 = arith.addf %28, %29 : vector<2x128xf32>
    %cst_20 = arith.constant 0.000000e+00 : f32
    %31 = vector.broadcast %cst_20 : f32 to vector<2x128xf32>
    %32 = arith.maximumf %30, %31 : vector<2x128xf32>
    %33 = arith.truncf %32 : vector<2x128xf32> to vector<2x128xbf16>
    %c0_21 = arith.constant 0 : index
    %c0_22 = arith.constant 0 : index
    %34 = vector.load %arg5[%c0_21, %c0_22] : memref<128x1024xbf16, #tpu.memory_space<vmem>>, vector<128x1024xbf16>
    %cst_23 = arith.constant dense<0.000000e+00> : vector<2x1024xf32>
    %35 = tpu.matmul %33, %34, %cst_23 {dimension_numbers = #tpu.dot_dimension_numbers<[1], [0], [0], [1], [0, 0, 1, 1], [], []>} : vector<2x128xbf16>, vector<128x1024xbf16>, vector<2x1024xf32> -> vector<2x1024xf32>
    %36 = vector.broadcast %4 : vector<1x1024xf32> to vector<2x1024xf32>
    %37 = arith.addf %35, %36 : vector<2x1024xf32>
    %38 = arith.negf %37 : vector<2x1024xf32>
    %39 = math.exp %38 : vector<2x1024xf32>
    %cst_24 = arith.constant 1.000000e+00 : f32
    %40 = vector.broadcast %cst_24 : f32 to vector<2x1024xf32>
    %41 = arith.addf %40, %39 : vector<2x1024xf32>
    %42 = arith.divf %40, %41 : vector<2x1024xf32>
    %c0_25 = arith.constant 0 : index
    %c0_26 = arith.constant 0 : index
    %43 = vector.load %arg7[%c0_25, %c0_26] : memref<2x1024xf32, #tpu.memory_space<vmem>>, vector<2x1024xf32>
    tpu.vector_store %arg7[%c0_25, %c0_26], %42 {strides = array<i32>} : memref<2x1024xf32, #tpu.memory_space<vmem>>, vector<2x1024xf32>,
    %cst_27 = arith.constant 0.000000e+00 : f32
    %44 = vector.broadcast %cst_27 : f32 to vector<2x1024xf32>
    %45 = arith.maximumf %37, %44 : vector<2x1024xf32>
    %46 = arith.mulf %37, %0 : vector<2x1024xf32>
    %47 = arith.subf %45, %46 : vector<2x1024xf32>
    %48 = math.absf %37 : vector<2x1024xf32>
    %cst_28 = arith.constant 0.000000e+00 : f32
    %49 = vector.broadcast %cst_28 : f32 to vector<2x1024xf32>
    %50 = arith.subf %49, %48 : vector<2x1024xf32>
    %51 = math.exp %50 : vector<2x1024xf32>
    %cst_29 = arith.constant 1.000000e+00 : f32
    %52 = vector.broadcast %cst_29 : f32 to vector<2x1024xf32>
    %53 = arith.addf %52, %51 : vector<2x1024xf32>
    %54 = math.log %53 : vector<2x1024xf32>
    %55 = arith.addf %47, %54 : vector<2x1024xf32>
    %cst_30 = arith.constant 1.000000e+00 : f32
    %56 = vector.broadcast %cst_30 : f32 to vector<2x32xf32>
    %57 = arith.addf %56, %19 : vector<2x32xf32>
    %58 = arith.mulf %18, %18 : vector<2x32xf32>
    %59 = arith.subf %57, %58 : vector<2x32xf32>
    %60 = arith.mulf %22, %22 : vector<2x32xf32>
    %61 = arith.subf %59, %60 : vector<2x32xf32>
    %cst_31 = arith.constant -5.000000e-01 : f32
    %62 = vector.broadcast %cst_31 : f32 to vector<2x32xf32>
    %63 = arith.mulf %62, %61 : vector<2x32xf32>
    %cst_32 = arith.constant dense<0.000000e+00> : vector<2xf32>
    %64 = vector.multi_reduction <add>, %55, %cst_32 [1] : vector<2x1024xf32> to vector<2xf32>
    %65 = vector.shape_cast %64 : vector<2xf32> to vector<2x1xf32>
    %cst_33 = arith.constant dense<0.000000e+00> : vector<2xf32>
    %66 = vector.multi_reduction <add>, %63, %cst_33 [1] : vector<2x32xf32> to vector<2xf32>
    %67 = vector.shape_cast %66 : vector<2xf32> to vector<2x1xf32>
    %68 = arith.addf %65, %67 : vector<2x1xf32>
    %cst_34 = arith.constant dense<0.000000e+00> : vector<1xf32>
    %69 = vector.multi_reduction <add>, %68, %cst_34 [0] : vector<2x1xf32> to vector<1xf32>
    %70 = vector.shape_cast %69 : vector<1xf32> to vector<1x1xf32>
    %c0_35 = arith.constant 0 : index
    %c64 = arith.constant 64 : index
    %71 = vector.load %arg8[%c0_35, %c64] : memref<2x128xf32, #tpu.memory_space<vmem>>, vector<1x1xf32>
    tpu.vector_store %arg8[%c0_35, %c64], %70 {strides = array<i32>} : memref<2x128xf32, #tpu.memory_space<vmem>>, vector<1x1xf32>,
    return
  }
}

</mosaic_0001>

<llo_original>
// kernel: vae_forward.1
$region0: #{vae_forward.1}
  #allocation0 [shape = 'u32[]', space=smem, size = 0x4, offset = 0x4, fixed_abs, tag = 'smem constant byte address 0x4 - core index']
  #allocation1 [shape = 'u32[144,128]{1,0:T(1,128)}', space=vmem, size = 0x12000, scoped, tag = 'internal scratch']
  %s0 = inlined_call_operand.vmem [shape: f32[2,1024], index: 0, kind: input, shape index: {}]
  %s1 = inlined_call_operand.vmem [shape: f32[2,32], index: 1, kind: input, shape index: {}]
  %s2 = inlined_call_operand.hbm [shape: bf16[1024,128], index: 2, kind: input, shape index: {}]
  %s3 = inlined_call_operand.vmem [shape: bf16[128,128], index: 3, kind: input, shape index: {}]
  %s4 = inlined_call_operand.vmem [shape: bf16[32,128], index: 4, kind: input, shape index: {}]
  %s5 = inlined_call_operand.hbm [shape: bf16[128,1024], index: 5, kind: input, shape index: {}]
  %s6 = inlined_call_operand.vmem [shape: f32[8,1024], index: 6, kind: input, shape index: {}]
  %s7 = inlined_call_operand.vmem [shape: f32[2,1024], index: 7, kind: output, shape index: {0}]
  %s8 = inlined_call_operand.vmem [shape: f32[2,128], index: 8, kind: output, shape index: {1}]
  %9 = xla_tuple %s7, %s8
  %s10 = sld [smem:[#allocation0]]
  $region54: #{vae_forward.1} parent=0
    _
  %s12 = ssub.s32 1, %s10
  %s13 = scalar_select 0, %s12, %s10
  $region1: #{vae_forward.1} parent=0
    #allocation2 [shape = 'u8[262144]{0}', space=vmem, size = 0x40000, scoped, tag = 'input window, operand 2, single buffered']
    #allocation3 [shape = 's32[1]{0}', space=sflag, size = 0x4, scoped, tag = 'scoped memory for vae_forward.1']
    #allocation4 [shape = 'u8[262144]{0}', space=vmem, size = 0x40000, scoped, tag = 'input window, operand 5, single buffered']
    #allocation5 [shape = 's32[1]{0}', space=sflag, size = 0x4, scoped, tag = 'scoped memory for vae_forward.1']
    %14 = vsyncpa [#allocation3], 0
    %15 = vsyncpa [#allocation5], 0
    // Predicated region
    $region2: #{vae_forward.1} parent=1 // pred_check
      _
    $region3: #{vae_forward.1} parent=1 // pred_check_branch
      %17 = sbr.rel (0) target = $region5
    $region4: #{vae_forward.1} parent=1 // pred_region
      _
    $region5: #{vae_forward.1} parent=1 // pred_fallthru
      _
    // Predicated region
    $region6: #{vae_forward.1} parent=1 // pred_check
      _
    $region7: #{vae_forward.1} parent=1 // pred_check_branch
      %19 = sbr.rel (0) target = $region9
    $region8: #{vae_forward.1} parent=1 // pred_region
      _
    $region9: #{vae_forward.1} parent=1 // pred_fallthru
      _
    // Predicated region
    $region10: #{vae_forward.1} parent=1 // pred_check
      _
    $region11: #{vae_forward.1} parent=1 // pred_check_branch
      %21 = sbr.rel (0) target = $region13
    $region12: #{vae_forward.1} parent=1 // pred_region
      %s23 = ssub.s32 8192, 8192
      %24 = vsyncadd [#allocation3], %s23
      %s25 = sshll.u32 [#allocation2], 4
      %s26 = int_to_ptr.vmem [resolvable:$true] %s25
      %31 = dma.hbm_to_vmem [thread:$0]  %s2, 8192, %s26, [#allocation3], 64, 64, 4
    $region13: #{vae_forward.1} parent=1 // pred_fallthru
      _
    // Predicated region
    $region14: #{vae_forward.1} parent=1 // pred_check
      _
    $region15: #{vae_forward.1} parent=1 // pred_check_branch
      %33 = sbr.rel (0) target = $region17
    $region16: #{vae_forward.1} parent=1 // pred_region
      _
    $region17: #{vae_forward.1} parent=1 // pred_fallthru
      _
    // Predicated region
    $region18: #{vae_forward.1} parent=1 // pred_check
      _
    $region19: #{vae_forward.1} parent=1 // pred_check_branch
      %35 = sbr.rel (0) target = $region21
    $region20: #{vae_forward.1} parent=1 // pred_region
      _
    $region21: #{vae_forward.1} parent=1 // pred_fallthru
      _
    // Predicated region
    $region22: #{vae_forward.1} parent=1 // pred_check
      _
    $region23: #{vae_forward.1} parent=1 // pred_check_branch
      %37 = sbr.rel (0) target = $region25
    $region24: #{vae_forward.1} parent=1 // pred_region
      %s39 = ssub.s32 8192, 8192
      %40 = vsyncadd [#allocation5], %s39
      %s41 = sshll.u32 [#allocation4], 4
      %s42 = int_to_ptr.vmem [resolvable:$true] %s41
      %47 = dma.hbm_to_vmem [thread:$0]  %s5, 8192, %s42, [#allocation5], 512, 512, 32
    $region25: #{vae_forward.1} parent=1 // pred_fallthru
      _
    // Predicated region
    $region26: #{vae_forward.1} parent=1 // pred_check
      _
    $region27: #{vae_forward.1} parent=1 // pred_check_branch
      %49 = sbr.rel (0) target = $region29
    $region28: #{vae_forward.1} parent=1 // pred_region
      _
    $region29: #{vae_forward.1} parent=1 // pred_fallthru
      _
    // Predicated region
    $region30: #{vae_forward.1} parent=1 // pred_check
      _
    $region31: #{vae_forward.1} parent=1 // pred_check_branch
      %51 = sbr.rel (0) target = $region33
    $region32: #{vae_forward.1} parent=1 // pred_region
      %52 = dma.done [#allocation3], 8192
    $region33: #{vae_forward.1} parent=1 // pred_fallthru
      _
    // Predicated region
    $region34: #{vae_forward.1} parent=1 // pred_check
      _
    $region35: #{vae_forward.1} parent=1 // pred_check_branch
      %54 = sbr.rel (0) target = $region37
    $region36: #{vae_forward.1} parent=1 // pred_region
      %55 = dma.done [#allocation5], 8192
    $region37: #{vae_forward.1} parent=1 // pred_fallthru
      _
    %v57 = vld [vmem:[%s0] sm:$0xff]
    %v58 = vld [vmem:[%s0 + $0x8] sm:$0xff]
    %v59 = vld [vmem:[%s6] ss:$0 sm:$0xff]
    %v60 = vld [vmem:[%s6 + $0x1] ss:$0 sm:$0xff]
    %v61 = vld [vmem:[%s6 + $0x2] ss:$0 sm:$0xff]
    %s62 = scalar_lea.vmem %s6, 3
    %v63 = vld [vmem:[%s62] ss:$8 sm:$0xf]
    %v64 = vld [vmem:[%s62] ss:$8 sm:$0xf0]
    %v65 = vor.u32 %v63, %v64
    %v68 = vcombine.high %v57, %v57
    %v70 = vunpack.c.l.s4 1983009808
    %v71 = vunpack.c.0.s8 %v70
    %v72 = vlaneseq
    %v73 = vshrl.u32 %v72, 7
    %v74 = vsub.s32 %v71, %v73
    %v75 = vrot.slane %v57, %v74
    %v77 = vunpack.c.l.s4 1983009808
    %v78 = vunpack.c.0.s8 %v77
    %v79 = vlaneseq
    %v80 = vshrl.u32 %v79, 7
    %v81 = vsub.s32 %v78, %v80
    %v82 = vrot.slane %v68, %v81
    %v83 = vcombine.high %v75, %v75
    %v84 = vcombine.high %v82, %v82
    %v85 = vcombine.high %v58, %v58
    %v87 = vunpack.c.l.s4 1983009808
    %v88 = vunpack.c.0.s8 %v87
    %v89 = vlaneseq
    %v90 = vshrl.u32 %v89, 7
    %v91 = vsub.s32 %v88, %v90
    %v92 = vrot.slane %v58, %v91
    %v94 = vunpack.c.l.s4 1983009808
    %v95 = vunpack.c.0.s8 %v94
    %v96 = vlaneseq
    %v97 = vshrl.u32 %v96, 7
    %v98 = vsub.s32 %v95, %v97
    %v99 = vrot.slane %v85, %v98
    %v100 = vcombine.high %v92, %v92
    %v101 = vcombine.high %v99, %v99
    %v110 = vpack.c.bf16 %v75, %v75
    %v111 = vpack.c.bf16 %v83, %v83
    %v112 = vpack.c.bf16 %v82, %v82
    %v113 = vpack.c.bf16 %v84, %v84
    %v114 = vpack.c.bf16 %v92, %v92
    %v115 = vpack.c.bf16 %v100, %v100
    %v116 = vpack.c.bf16 %v99, %v99
    %v117 = vpack.c.bf16 %v101, %v101
    %v118 = vld [vmem:[#allocation2] sm:$0xf]
    %v119 = vld [vmem:[#allocation2 + $0x4] sm:$0xf]
    %v120 = vld [vmem:[#allocation2 + $0x8] sm:$0xf]
    %v121 = vld [vmem:[#allocation2 + $0xc] sm:$0xf]
    %v122 = vld [vmem:[#allocation2 + $0x10] sm:$0xf]
    %v123 = vld [vmem:[#allocation2 + $0x14] sm:$0xf]
    %v124 = vld [vmem:[#allocation2 + $0x18] sm:$0xf]
    %v125 = vld [vmem:[#allocation2 + $0x1c] sm:$0xf]
    %v126 = vld [vmem:[#allocation2 + $0x20] sm:$0xf]
    %v127 = vld [vmem:[#allocation2 + $0x24] sm:$0xf]
    %v128 = vld [vmem:[#allocation2 + $0x28] sm:$0xf]
    %v129 = vld [vmem:[#allocation2 + $0x2c] sm:$0xf]
    %v130 = vld [vmem:[#allocation2 + $0x30] sm:$0xf]
    %v131 = vld [vmem:[#allocation2 + $0x34] sm:$0xf]
    %v132 = vld [vmem:[#allocation2 + $0x38] sm:$0xf]
    %v133 = vld [vmem:[#allocation2 + $0x3c] sm:$0xf]
    %v134 = vld [vmem:[#allocation2 + $0x40] sm:$0xf]
    %v135 = vld [vmem:[#allocation2 + $0x44] sm:$0xf]
    %v136 = vld [vmem:[#allocation2 + $0x48] sm:$0xf]
    %v137 = vld [vmem:[#allocation2 + $0x4c] sm:$0xf]
    %v138 = vld [vmem:[#allocation2 + $0x50] sm:$0xf]
    %v139 = vld [vmem:[#allocation2 + $0x54] sm:$0xf]
    %v140 = vld [vmem:[#allocation2 + $0x58] sm:$0xf]
    %v141 = vld [vmem:[#allocation2 + $0x5c] sm:$0xf]
    %v142 = vld [vmem:[#allocation2 + $0x60] sm:$0xf]
    %v143 = vld [vmem:[#allocation2 + $0x64] sm:$0xf]
    %v144 = vld [vmem:[#allocation2 + $0x68] sm:$0xf]
    %v145 = vld [vmem:[#allocation2 + $0x6c] sm:$0xf]
    %v146 = vld [vmem:[#allocation2 + $0x70] sm:$0xf]
    %v147 = vld [vmem:[#allocation2 + $0x74] sm:$0xf]
    %v148 = vld [vmem:[#allocation2 + $0x78] sm:$0xf]
    %v149 = vld [vmem:[#allocation2 + $0x7c] sm:$0xf]
    %v150 = vld [vmem:[#allocation2 + $0x80] sm:$0xf]
    %v151 = vld [vmem:[#allocation2 + $0x84] sm:$0xf]
    %v152 = vld [vmem:[#allocation2 + $0x88] sm:$0xf]
    %v153 = vld [vmem:[#allocation2 + $0x8c] sm:$0xf]
    %v154 = vld [vmem:[#allocation2 + $0x90] sm:$0xf]
    %v155 = vld [vmem:[#allocation2 + $0x94] sm:$0xf]
    %v156 = vld [vmem:[#allocation2 + $0x98] sm:$0xf]
    %v157 = vld [vmem:[#allocation2 + $0x9c] sm:$0xf]
    %v158 = vld [vmem:[#allocation2 + $0xa0] sm:$0xf]
    %v159 = vld [vmem:[#allocation2 + $0xa4] sm:$0xf]
    %v160 = vld [vmem:[#allocation2 + $0xa8] sm:$0xf]
    %v161 = vld [vmem:[#allocation2 + $0xac] sm:$0xf]
    %v162 = vld [vmem:[#allocation2 + $0xb0] sm:$0xf]
    %v163 = vld [vmem:[#allocation2 + $0xb4] sm:$0xf]
    %v164 = vld [vmem:[#allocation2 + $0xb8] sm:$0xf]
    %v165 = vld [vmem:[#allocation2 + $0xbc] sm:$0xf]
    %v166 = vld [vmem:[#allocation2 + $0xc0] sm:$0xf]
    %v167 = vld [vmem:[#allocation2 + $0xc4] sm:$0xf]
    %v168 = vld [vmem:[#allocation2 + $0xc8] sm:$0xf]
    %v169 = vld [vmem:[#allocation2 + $0xcc] sm:$0xf]
    %v170 = vld [vmem:[#allocation2 + $0xd0] sm:$0xf]
    %v171 = vld [vmem:[#allocation2 + $0xd4] sm:$0xf]
    %v172 = vld [vmem:[#allocation2 + $0xd8] sm:$0xf]
    %v173 = vld [vmem:[#allocation2 + $0xdc] sm:$0xf]
    %v174 = vld [vmem:[#allocation2 + $0xe0] sm:$0xf]
    %v175 = vld [vmem:[#allocation2 + $0xe4] sm:$0xf]
    %v176 = vld [vmem:[#allocation2 + $0xe8] sm:$0xf]
    %v177 = vld [vmem:[#allocation2 + $0xec] sm:$0xf]
    %v178 = vld [vmem:[#allocation2 + $0xf0] sm:$0xf]
    %v179 = vld [vmem:[#allocation2 + $0xf4] sm:$0xf]
    %v180 = vld [vmem:[#allocation2 + $0xf8] sm:$0xf]
    %v181 = vld [vmem:[#allocation2 + $0xfc] sm:$0xf]
    %v182 = vld [vmem:[#allocation2 + $0x100] sm:$0xf]
    %v183 = vld [vmem:[#allocation2 + $0x104] sm:$0xf]
    %v184 = vld [vmem:[#allocation2 + $0x108] sm:$0xf]
    %v185 = vld [vmem:[#allocation2 + $0x10c] sm:$0xf]
    %v186 = vld [vmem:[#allocation2 + $0x110] sm:$0xf]
    %v187 = vld [vmem:[#allocation2 + $0x114] sm:$0xf]
    %v188 = vld [vmem:[#allocation2 + $0x118] sm:$0xf]
    %v189 = vld [vmem:[#allocation2 + $0x11c] sm:$0xf]
    %v190 = vld [vmem:[#allocation2 + $0x120] sm:$0xf]
    %v191 = vld [vmem:[#allocation2 + $0x124] sm:$0xf]
    %v192 = vld [vmem:[#allocation2 + $0x128] sm:$0xf]
    %v193 = vld [vmem:[#allocation2 + $0x12c] sm:$0xf]
    %v194 = vld [vmem:[#allocation2 + $0x130] sm:$0xf]
    %v195 = vld [vmem:[#allocation2 + $0x134] sm:$0xf]
    %v196 = vld [vmem:[#allocation2 + $0x138] sm:$0xf]
    %v197 = vld [vmem:[#allocation2 + $0x13c] sm:$0xf]
    %v198 = vld [vmem:[#allocation2 + $0x140] sm:$0xf]
    %v199 = vld [vmem:[#allocation2 + $0x144] sm:$0xf]
    %v200 = vld [vmem:[#allocation2 + $0x148] sm:$0xf]
    %v201 = vld [vmem:[#allocation2 + $0x14c] sm:$0xf]
    %v202 = vld [vmem:[#allocation2 + $0x150] sm:$0xf]
    %v203 = vld [vmem:[#allocation2 + $0x154] sm:$0xf]
    %v204 = vld [vmem:[#allocation2 + $0x158] sm:$0xf]
    %v205 = vld [vmem:[#allocation2 + $0x15c] sm:$0xf]
    %v206 = vld [vmem:[#allocation2 + $0x160] sm:$0xf]
    %v207 = vld [vmem:[#allocation2 + $0x164] sm:$0xf]
    %v208 = vld [vmem:[#allocation2 + $0x168] sm:$0xf]
    %v209 = vld [vmem:[#allocation2 + $0x16c] sm:$0xf]
    %v210 = vld [vmem:[#allocation2 + $0x170] sm:$0xf]
    %v211 = vld [vmem:[#allocation2 + $0x174] sm:$0xf]
    %v212 = vld [vmem:[#allocation2 + $0x178] sm:$0xf]
    %v213 = vld [vmem:[#allocation2 + $0x17c] sm:$0xf]
    %v214 = vld [vmem:[#allocation2 + $0x180] sm:$0xf]
    %v215 = vld [vmem:[#allocation2 + $0x184] sm:$0xf]
    %v216 = vld [vmem:[#allocation2 + $0x188] sm:$0xf]
    %v217 = vld [vmem:[#allocation2 + $0x18c] sm:$0xf]
    %v218 = vld [vmem:[#allocation2 + $0x190] sm:$0xf]
    %v219 = vld [vmem:[#allocation2 + $0x194] sm:$0xf]
    %v220 = vld [vmem:[#allocation2 + $0x198] sm:$0xf]
    %v221 = vld [vmem:[#allocation2 + $0x19c] sm:$0xf]
    %v222 = vld [vmem:[#allocation2 + $0x1a0] sm:$0xf]
    %v223 = vld [vmem:[#allocation2 + $0x1a4] sm:$0xf]
    %v224 = vld [vmem:[#allocation2 + $0x1a8] sm:$0xf]
    %v225 = vld [vmem:[#allocation2 + $0x1ac] sm:$0xf]
    %v226 = vld [vmem:[#allocation2 + $0x1b0] sm:$0xf]
    %v227 = vld [vmem:[#allocation2 + $0x1b4] sm:$0xf]
    %v228 = vld [vmem:[#allocation2 + $0x1b8] sm:$0xf]
    %v229 = vld [vmem:[#allocation2 + $0x1bc] sm:$0xf]
    %v230 = vld [vmem:[#allocation2 + $0x1c0] sm:$0xf]
    %v231 = vld [vmem:[#allocation2 + $0x1c4] sm:$0xf]
    %v232 = vld [vmem:[#allocation2 + $0x1c8] sm:$0xf]
    %v233 = vld [vmem:[#allocation2 + $0x1cc] sm:$0xf]
    %v234 = vld [vmem:[#allocation2 + $0x1d0] sm:$0xf]
    %v235 = vld [vmem:[#allocation2 + $0x1d4] sm:$0xf]
    %v236 = vld [vmem:[#allocation2 + $0x1d8] sm:$0xf]
    %v237 = vld [vmem:[#allocation2 + $0x1dc] sm:$0xf]
    %v238 = vld [vmem:[#allocation2 + $0x1e0] sm:$0xf]
    %v239 = vld [vmem:[#allocation2 + $0x1e4] sm:$0xf]
    %v240 = vld [vmem:[#allocation2 + $0x1e8] sm:$0xf]
    %v241 = vld [vmem:[#allocation2 + $0x1ec] sm:$0xf]
    %v242 = vld [vmem:[#allocation2 + $0x1f0] sm:$0xf]
    %v243 = vld [vmem:[#allocation2 + $0x1f4] sm:$0xf]
    %v244 = vld [vmem:[#allocation2 + $0x1f8] sm:$0xf]
    %v245 = vld [vmem:[#allocation2 + $0x1fc] sm:$0xf]
    %v374 = vunpack.c.l.b16 %v118
    %v375 = vunpack.c.l.b16 %v119
    %v376 = vunpack.c.l.b16 %v120
    %v377 = vunpack.c.l.b16 %v121
    %v378 = vunpack.c.l.b16 %v122
    %v379 = vunpack.c.l.b16 %v123
    %v380 = vunpack.c.l.b16 %v124
    %v381 = vunpack.c.l.b16 %v125
    %v382 = vunpack.c.l.b16 %v126
    %v383 = vunpack.c.l.b16 %v127
    %v384 = vunpack.c.l.b16 %v128
    %v385 = vunpack.c.l.b16 %v129
    %v386 = vunpack.c.l.b16 %v130
    %v387 = vunpack.c.l.b16 %v131
    %v388 = vunpack.c.l.b16 %v132
    %v389 = vunpack.c.l.b16 %v133
    %v390 = vunpack.c.l.b16 %v134
    %v391 = vunpack.c.l.b16 %v135
    %v392 = vunpack.c.l.b16 %v136
    %v393 = vunpack.c.l.b16 %v137
    %v394 = vunpack.c.l.b16 %v138
    %v395 = vunpack.c.l.b16 %v139
    %v396 = vunpack.c.l.b16 %v140
    %v397 = vunpack.c.l.b16 %v141
    %v398 = vunpack.c.l.b16 %v142
    %v399 = vunpack.c.l.b16 %v143
    %v400 = vunpack.c.l.b16 %v144
    %v401 = vunpack.c.l.b16 %v145
    %v402 = vunpack.c.l.b16 %v146
    %v403 = vunpack.c.l.b16 %v147
    %v404 = vunpack.c.l.b16 %v148
    %v405 = vunpack.c.l.b16 %v149
    %v406 = vunpack.c.l.b16 %v150
    %v407 = vunpack.c.l.b16 %v151
    %v408 = vunpack.c.l.b16 %v152
    %v409 = vunpack.c.l.b16 %v153
    %v410 = vunpack.c.l.b16 %v154
    %v411 = vunpack.c.l.b16 %v155
    %v412 = vunpack.c.l.b16 %v156
    %v413 = vunpack.c.l.b16 %v157
    %v414 = vunpack.c.l.b16 %v158
    %v415 = vunpack.c.l.b16 %v159
    %v416 = vunpack.c.l.b16 %v160
    %v417 = vunpack.c.l.b16 %v161
    %v418 = vunpack.c.l.b16 %v162
    %v419 = vunpack.c.l.b16 %v163
    %v420 = vunpack.c.l.b16 %v164
    %v421 = vunpack.c.l.b16 %v165
    %v422 = vunpack.c.l.b16 %v166
    %v423 = vunpack.c.l.b16 %v167
    %v424 = vunpack.c.l.b16 %v168
    %v425 = vunpack.c.l.b16 %v169
    %v426 = vunpack.c.l.b16 %v170
    %v427 = vunpack.c.l.b16 %v171
    %v428 = vunpack.c.l.b16 %v172
    %v429 = vunpack.c.l.b16 %v173
    %v430 = vunpack.c.l.b16 %v174
    %v431 = vunpack.c.l.b16 %v175
    %v432 = vunpack.c.l.b16 %v176
    %v433 = vunpack.c.l.b16 %v177
    %v434 = vunpack.c.l.b16 %v178
    %v435 = vunpack.c.l.b16 %v179
    %v436 = vunpack.c.l.b16 %v180
    %v437 = vunpack.c.l.b16 %v181
    %v438 = vunpack.c.l.b16 %v182
    %v439 = vunpack.c.l.b16 %v183
    %v440 = vunpack.c.l.b16 %v184
    %v441 = vunpack.c.l.b16 %v185
    %v442 = vunpack.c.l.b16 %v186
    %v443 = vunpack.c.l.b16 %v187
    %v444 = vunpack.c.l.b16 %v188
    %v445 = vunpack.c.l.b16 %v189
    %v446 = vunpack.c.l.b16 %v190
    %v447 = vunpack.c.l.b16 %v191
    %v448 = vunpack.c.l.b16 %v192
    %v449 = vunpack.c.l.b16 %v193
    %v450 = vunpack.c.l.b16 %v194
    %v451 = vunpack.c.l.b16 %v195
    %v452 = vunpack.c.l.b16 %v196
    %v453 = vunpack.c.l.b16 %v197
    %v454 = vunpack.c.l.b16 %v198
    %v455 = vunpack.c.l.b16 %v199
    %v456 = vunpack.c.l.b16 %v200
    %v457 = vunpack.c.l.b16 %v201
    %v458 = vunpack.c.l.b16 %v202
    %v459 = vunpack.c.l.b16 %v203
    %v460 = vunpack.c.l.b16 %v204
    %v461 = vunpack.c.l.b16 %v205
    %v462 = vunpack.c.l.b16 %v206
    %v463 = vunpack.c.l.b16 %v207
    %v464 = vunpack.c.l.b16 %v208
    %v465 = vunpack.c.l.b16 %v209
    %v466 = vunpack.c.l.b16 %v210
    %v467 = vunpack.c.l.b16 %v211
    %v468 = vunpack.c.l.b16 %v212
    %v469 = vunpack.c.l.b16 %v213
    %v470 = vunpack.c.l.b16 %v214
    %v471 = vunpack.c.l.b16 %v215
    %v472 = vunpack.c.l.b16 %v216
    %v473 = vunpack.c.l.b16 %v217
    %v474 = vunpack.c.l.b16 %v218
    %v475 = vunpack.c.l.b16 %v219
    %v476 = vunpack.c.l.b16 %v220
    %v477 = vunpack.c.l.b16 %v221
    %v478 = vunpack.c.l.b16 %v222
    %v479 = vunpack.c.l.b16 %v223
    %v480 = vunpack.c.l.b16 %v224
    %v481 = vunpack.c.l.b16 %v225
    %v482 = vunpack.c.l.b16 %v226
    %v483 = vunpack.c.l.b16 %v227
    %v484 = vunpack.c.l.b16 %v228
    %v485 = vunpack.c.l.b16 %v229
    %v486 = vunpack.c.l.b16 %v230
    %v487 = vunpack.c.l.b16 %v231
    %v488 = vunpack.c.l.b16 %v232
    %v489 = vunpack.c.l.b16 %v233
    %v490 = vunpack.c.l.b16 %v234
    %v491 = vunpack.c.l.b16 %v235
    %v492 = vunpack.c.l.b16 %v236
    %v493 = vunpack.c.l.b16 %v237
    %v494 = vunpack.c.l.b16 %v238
    %v495 = vunpack.c.l.b16 %v239
    %v496 = vunpack.c.l.b16 %v240
    %v497 = vunpack.c.l.b16 %v241
    %v498 = vunpack.c.l.b16 %v242
    %v499 = vunpack.c.l.b16 %v243
    %v500 = vunpack.c.l.b16 %v244
    %v501 = vunpack.c.l.b16 %v245
    %v502 = vpack.c.b16 %v375, %v374
    %v503 = vpack.c.b16 %v377, %v376
    %v504 = vpack.c.b16 %v379, %v378
    %v505 = vpack.c.b16 %v381, %v380
    %v506 = vpack.c.b16 %v383, %v382
    %v507 = vpack.c.b16 %v385, %v384
    %v508 = vpack.c.b16 %v387, %v386
    %v509 = vpack.c.b16 %v389, %v388
    %v510 = vpack.c.b16 %v391, %v390
    %v511 = vpack.c.b16 %v393, %v392
    %v512 = vpack.c.b16 %v395, %v394
    %v513 = vpack.c.b16 %v397, %v396
    %v514 = vpack.c.b16 %v399, %v398
    %v515 = vpack.c.b16 %v401, %v400
    %v516 = vpack.c.b16 %v403, %v402
    %v517 = vpack.c.b16 %v405, %v404
    %v518 = vpack.c.b16 %v407, %v406
    %v519 = vpack.c.b16 %v409, %v408
    %v520 = vpack.c.b16 %v411, %v410
    %v521 = vpack.c.b16 %v413, %v412
    %v522 = vpack.c.b16 %v415, %v414
    %v523 = vpack.c.b16 %v417, %v416
    %v524 = vpack.c.b16 %v419, %v418
    %v525 = vpack.c.b16 %v421, %v420
    %v526 = vpack.c.b16 %v423, %v422
    %v527 = vpack.c.b16 %v425, %v424
    %v528 = vpack.c.b16 %v427, %v426
    %v529 = vpack.c.b16 %v429, %v428
    %v530 = vpack.c.b16 %v431, %v430
    %v531 = vpack.c.b16 %v433, %v432
    %v532 = vpack.c.b16 %v435, %v434
    %v533 = vpack.c.b16 %v437, %v436
    %v534 = vpack.c.b16 %v439, %v438
    %v535 = vpack.c.b16 %v441, %v440
    %v536 = vpack.c.b16 %v443, %v442
    %v537 = vpack.c.b16 %v445, %v444
    %v538 = vpack.c.b16 %v447, %v446
    %v539 = vpack.c.b16 %v449, %v448
    %v540 = vpack.c.b16 %v451, %v450
    %v541 = vpack.c.b16 %v453, %v452
    %v542 = vpack.c.b16 %v455, %v454
    %v543 = vpack.c.b16 %v457, %v456
    %v544 = vpack.c.b16 %v459, %v458
    %v545 = vpack.c.b16 %v461, %v460
    %v546 = vpack.c.b16 %v463, %v462
    %v547 = vpack.c.b16 %v465, %v464
    %v548 = vpack.c.b16 %v467, %v466
    %v549 = vpack.c.b16 %v469, %v468
    %v550 = vpack.c.b16 %v471, %v470
    %v551 = vpack.c.b16 %v473, %v472
    %v552 = vpack.c.b16 %v475, %v474
    %v553 = vpack.c.b16 %v477, %v476
    %v554 = vpack.c.b16 %v479, %v478
    %v555 = vpack.c.b16 %v481, %v480
    %v556 = vpack.c.b16 %v483, %v482
    %v557 = vpack.c.b16 %v485, %v484
    %v558 = vpack.c.b16 %v487, %v486
    %v559 = vpack.c.b16 %v489, %v488
    %v560 = vpack.c.b16 %v491, %v490
    %v561 = vpack.c.b16 %v493, %v492
    %v562 = vpack.c.b16 %v495, %v494
    %v563 = vpack.c.b16 %v497, %v496
    %v564 = vpack.c.b16 %v499, %v498
    %v565 = vpack.c.b16 %v501, %v500
    %630 = vmatprep.subr.bf16.mxu0 0
    %631 = vmatpush1.bf16.msra.mxu0 %v502
    %632 = vmatprep.subr.bf16.mxu0 0
    %633 = vmatpush1.bf16.msra.mxu0 %v503
    %634 = vmatprep.subr.bf16.mxu0 0
    %635 = vmatpush1.bf16.msra.mxu0 %v504
    %636 = vmatprep.subr.bf16.mxu0 0
    %637 = vmatpush1.bf16.msra.mxu0 %v505
    %638 = vmatprep.subr.bf16.mxu0 0
    %639 = vmatpush1.bf16.msra.mxu0 %v506
    %640 = vmatprep.subr.bf16.mxu0 0
    %641 = vmatpush1.bf16.msra.mxu0 %v507
    %642 = vmatprep.subr.bf16.mxu0 0
    %643 = vmatpush1.bf16.msra.mxu0 %v508
    %644 = vmatprep.subr.bf16.mxu0 0
    %645 = vmatpush1.bf16.msra.mxu0 %v509
    %646 = vmatprep.subr.bf16.mxu0 0
    %647 = vmatpush1.bf16.msra.mxu0 %v510
    %648 = vmatprep.subr.bf16.mxu0 0
    %649 = vmatpush1.bf16.msra.mxu0 %v511
    %650 = vmatprep.subr.bf16.mxu0 0
    %651 = vmatpush1.bf16.msra.mxu0 %v512
    %652 = vmatprep.subr.bf16.mxu0 0
    %653 = vmatpush1.bf16.msra.mxu0 %v513
    %654 = vmatprep.subr.bf16.mxu0 0
    %655 = vmatpush1.bf16.msra.mxu0 %v514
    %656 = vmatprep.subr.bf16.mxu0 0
    %657 = vmatpush1.bf16.msra.mxu0 %v515
    %658 = vmatprep.subr.bf16.mxu0 0
    %659 = vmatpush1.bf16.msra.mxu0 %v516
    %660 = vmatprep.subr.bf16.mxu0 0
    %661 = vmatpush1.bf16.msra.mxu0 %v517
    %662 = vmatprep.mubr.bf16.mxu0 %v111
    %663 = vmatmul.mubr.bf16.gmra.mrb[0].mxu0 %v110
    %v664 = vpop.f32.mrb[0].mxu0
    %v665 = vadd.f32 %v59, %v664
    %v666 = vpop.f32.mrb[0].mxu0
    %v667 = vpop.f32.mrb[0].mxu0
    %v668 = vpop.f32.mrb[0].mxu0
    %669 = vdwg.mxu0
    %670 = vmatprep.subr.bf16.mxu0 0
    %671 = vmatpush1.bf16.msra.mxu0 %v518
    %672 = vmatprep.subr.bf16.mxu0 0
    %673 = vmatpush1.bf16.msra.mxu0 %v519
    %674 = vmatprep.subr.bf16.mxu0 0
    %675 = vmatpush1.bf16.msra.mxu0 %v520
    %676 = vmatprep.subr.bf16.mxu0 0
    %677 = vmatpush1.bf16.msra.mxu0 %v521
    %678 = vmatprep.subr.bf16.mxu0 0
    %679 = vmatpush1.bf16.msra.mxu0 %v522
    %680 = vmatprep.subr.bf16.mxu0 0
    %681 = vmatpush1.bf16.msra.mxu0 %v523
    %682 = vmatprep.subr.bf16.mxu0 0
    %683 = vmatpush1.bf16.msra.mxu0 %v524
    %684 = vmatprep.subr.bf16.mxu0 0
    %685 = vmatpush1.bf16.msra.mxu0 %v525
    %686 = vmatprep.subr.bf16.mxu0 0
    %687 = vmatpush1.bf16.msra.mxu0 %v526
    %688 = vmatprep.subr.bf16.mxu0 0
    %689 = vmatpush1.bf16.msra.mxu0 %v527
    %690 = vmatprep.subr.bf16.mxu0 0
    %691 = vmatpush1.bf16.msra.mxu0 %v528
    %692 = vmatprep.subr.bf16.mxu0 0
    %693 = vmatpush1.bf16.msra.mxu0 %v529
    %694 = vmatprep.subr.bf16.mxu0 0
    %695 = vmatpush1.bf16.msra.mxu0 %v530
    %696 = vmatprep.subr.bf16.mxu0 0
    %697 = vmatpush1.bf16.msra.mxu0 %v531
    %698 = vmatprep.subr.bf16.mxu0 0
    %699 = vmatpush1.bf16.msra.mxu0 %v532
    %700 = vmatprep.subr.bf16.mxu0 0
    %701 = vmatpush1.bf16.msra.mxu0 %v533
    %702 = vmatprep.mubr.bf16.mxu0 %v113
    %703 = vmatmul.mubr.bf16.gmra.mrb[0].mxu0 %v112
    %v704 = vpop.f32.mrb[0].mxu0
    %v705 = vadd.f32 %v665, %v704
    %v706 = vpop.f32.mrb[0].mxu0
    %v707 = vpop.f32.mrb[0].mxu0
    %v708 = vpop.f32.mrb[0].mxu0
    %709 = vdwg.mxu0
    %710 = vmatprep.subr.bf16.mxu0 0
    %711 = vmatpush1.bf16.msra.mxu0 %v534
    %712 = vmatprep.subr.bf16.mxu0 0
    %713 = vmatpush1.bf16.msra.mxu0 %v535
    %714 = vmatprep.subr.bf16.mxu0 0
    %715 = vmatpush1.bf16.msra.mxu0 %v536
    %716 = vmatprep.subr.bf16.mxu0 0
    %717 = vmatpush1.bf16.msra.mxu0 %v537
    %718 = vmatprep.subr.bf16.mxu0 0
    %719 = vmatpush1.bf16.msra.mxu0 %v538
    %720 = vmatprep.subr.bf16.mxu0 0
    %721 = vmatpush1.bf16.msra.mxu0 %v539
    %722 = vmatprep.subr.bf16.mxu0 0
    %723 = vmatpush1.bf16.msra.mxu0 %v540
    %724 = vmatprep.subr.bf16.mxu0 0
    %725 = vmatpush1.bf16.msra.mxu0 %v541
    %726 = vmatprep.subr.bf16.mxu0 0
    %727 = vmatpush1.bf16.msra.mxu0 %v542
    %728 = vmatprep.subr.bf16.mxu0 0
    %729 = vmatpush1.bf16.msra.mxu0 %v543
    %730 = vmatprep.subr.bf16.mxu0 0
    %731 = vmatpush1.bf16.msra.mxu0 %v544
    %732 = vmatprep.subr.bf16.mxu0 0
    %733 = vmatpush1.bf16.msra.mxu0 %v545
    %734 = vmatprep.subr.bf16.mxu0 0
    %735 = vmatpush1.bf16.msra.mxu0 %v546
    %736 = vmatprep.subr.bf16.mxu0 0
    %737 = vmatpush1.bf16.msra.mxu0 %v547
    %738 = vmatprep.subr.bf16.mxu0 0
    %739 = vmatpush1.bf16.msra.mxu0 %v548
    %740 = vmatprep.subr.bf16.mxu0 0
    %741 = vmatpush1.bf16.msra.mxu0 %v549
    %742 = vmatprep.mubr.bf16.mxu0 %v115
    %743 = vmatmul.mubr.bf16.gmra.mrb[0].mxu0 %v114
    %v744 = vpop.f32.mrb[0].mxu0
    %v745 = vadd.f32 %v705, %v744
    %v746 = vpop.f32.mrb[0].mxu0
    %v747 = vpop.f32.mrb[0].mxu0
    %v748 = vpop.f32.mrb[0].mxu0
    %749 = vdwg.mxu0
    %750 = vmatprep.subr.bf16.mxu0 0
    %751 = vmatpush1.bf16.msra.mxu0 %v550
    %752 = vmatprep.subr.bf16.mxu0 0
    %753 = vmatpush1.bf16.msra.mxu0 %v551
    %754 = vmatprep.subr.bf16.mxu0 0
    %755 = vmatpush1.bf16.msra.mxu0 %v552
    %756 = vmatprep.subr.bf16.mxu0 0
    %757 = vmatpush1.bf16.msra.mxu0 %v553
    %758 = vmatprep.subr.bf16.mxu0 0
    %759 = vmatpush1.bf16.msra.mxu0 %v554
    %760 = vmatprep.subr.bf16.mxu0 0
    %761 = vmatpush1.bf16.msra.mxu0 %v555
    %762 = vmatprep.subr.bf16.mxu0 0
    %763 = vmatpush1.bf16.msra.mxu0 %v556
    %764 = vmatprep.subr.bf16.mxu0 0
    %765 = vmatpush1.bf16.msra.mxu0 %v557
    %766 = vmatprep.subr.bf16.mxu0 0
    %767 = vmatpush1.bf16.msra.mxu0 %v558
    %768 = vmatprep.subr.bf16.mxu0 0
    %769 = vmatpush1.bf16.msra.mxu0 %v559
    %770 = vmatprep.subr.bf16.mxu0 0
    %771 = vmatpush1.bf16.msra.mxu0 %v560
    %772 = vmatprep.subr.bf16.mxu0 0
    %773 = vmatpush1.bf16.msra.mxu0 %v561
    %774 = vmatprep.subr.bf16.mxu0 0
    %775 = vmatpush1.bf16.msra.mxu0 %v562
    %776 = vmatprep.subr.bf16.mxu0 0
    %777 = vmatpush1.bf16.msra.mxu0 %v563
    %778 = vmatprep.subr.bf16.mxu0 0
    %779 = vmatpush1.bf16.msra.mxu0 %v564
    %780 = vmatprep.subr.bf16.mxu0 0
    %781 = vmatpush1.bf16.msra.mxu0 %v565
    %782 = vmatprep.mubr.bf16.mxu0 %v117
    %783 = vmatmul.mubr.bf16.gmra.mrb[0].mxu0 %v116
    %v784 = vpop.f32.mrb[0].mxu0
    %v785 = vadd.f32 %v745, %v784
    %v786 = vpop.f32.mrb[0].mxu0
    %v787 = vpop.f32.mrb[0].mxu0
    %v788 = vpop.f32.mrb[0].mxu0
    %789 = vdwg.mxu0
    %v790 = vmax.f32 %v785, 0.0
    %v791 = vpack.c.bf16 %v790, %v790
    %v792 = vld [vmem:[%s3] sm:$0xf]
    %v793 = vld [vmem:[%s3 + $0x4] sm:$0xf]
    %v794 = vld [vmem:[%s3 + $0x8] sm:$0xf]
    %v795 = vld [vmem:[%s3 + $0xc] sm:$0xf]
    %v796 = vld [vmem:[%s3 + $0x10] sm:$0xf]
    %v797 = vld [vmem:[%s3 + $0x14] sm:$0xf]
    %v798 = vld [vmem:[%s3 + $0x18] sm:$0xf]
    %v799 = vld [vmem:[%s3 + $0x1c] sm:$0xf]
    %v800 = vld [vmem:[%s3 + $0x20] sm:$0xf]
    %v801 = vld [vmem:[%s3 + $0x24] sm:$0xf]
    %v802 = vld [vmem:[%s3 + $0x28] sm:$0xf]
    %v803 = vld [vmem:[%s3 + $0x2c] sm:$0xf]
    %v804 = vld [vmem:[%s3 + $0x30] sm:$0xf]
    %v805 = vld [vmem:[%s3 + $0x34] sm:$0xf]
    %v806 = vld [vmem:[%s3 + $0x38] sm:$0xf]
    %v807 = vld [vmem:[%s3 + $0x3c] sm:$0xf]
    %v824 = vunpack.c.l.b16 %v792
    %v825 = vunpack.c.l.b16 %v793
    %v826 = vunpack.c.l.b16 %v794
    %v827 = vunpack.c.l.b16 %v795
    %v828 = vunpack.c.l.b16 %v796
    %v829 = vunpack.c.l.b16 %v797
    %v830 = vunpack.c.l.b16 %v798
    %v831 = vunpack.c.l.b16 %v799
    %v832 = vunpack.c.l.b16 %v800
    %v833 = vunpack.c.l.b16 %v801
    %v834 = vunpack.c.l.b16 %v802
    %v835 = vunpack.c.l.b16 %v803
    %v836 = vunpack.c.l.b16 %v804
    %v837 = vunpack.c.l.b16 %v805
    %v838 = vunpack.c.l.b16 %v806
    %v839 = vunpack.c.l.b16 %v807
    %v840 = vpack.c.b16 %v825, %v824
    %v841 = vpack.c.b16 %v827, %v826
    %v842 = vpack.c.b16 %v829, %v828
    %v843 = vpack.c.b16 %v831, %v830
    %v844 = vpack.c.b16 %v833, %v832
    %v845 = vpack.c.b16 %v835, %v834
    %v846 = vpack.c.b16 %v837, %v836
    %v847 = vpack.c.b16 %v839, %v838
    %856 = vmatprep.subr.bf16.mxu0 0
    %857 = vmatpush1.bf16.msra.mxu0 %v840
    %858 = vmatprep.subr.bf16.mxu0 0
    %859 = vmatpush1.bf16.msra.mxu0 %v841
    %860 = vmatprep.subr.bf16.mxu0 0
    %861 = vmatpush1.bf16.msra.mxu0 %v842
    %862 = vmatprep.subr.bf16.mxu0 0
    %863 = vmatpush1.bf16.msra.mxu0 %v843
    %864 = vmatprep.subr.bf16.mxu0 0
    %865 = vmatpush1.bf16.msra.mxu0 %v844
    %866 = vmatprep.subr.bf16.mxu0 0
    %867 = vmatpush1.bf16.msra.mxu0 %v845
    %868 = vmatprep.subr.bf16.mxu0 0
    %869 = vmatpush1.bf16.msra.mxu0 %v846
    %870 = vmatprep.subr.bf16.mxu0 0
    %871 = vmatpush1.bf16.msra.mxu0 %v847
    %872 = vmatprep.subr.bf16.mxu0 0
    %873 = vmatpush1.bf16.msra.mxu0 0
    %874 = vmatprep.subr.bf16.mxu0 0
    %875 = vmatpush1.bf16.msra.mxu0 0
    %876 = vmatprep.subr.bf16.mxu0 0
    %877 = vmatpush1.bf16.msra.mxu0 0
    %878 = vmatprep.subr.bf16.mxu0 0
    %879 = vmatpush1.bf16.msra.mxu0 0
    %880 = vmatprep.subr.bf16.mxu0 0
    %881 = vmatpush1.bf16.msra.mxu0 0
    %882 = vmatprep.subr.bf16.mxu0 0
    %883 = vmatpush1.bf16.msra.mxu0 0
    %884 = vmatprep.subr.bf16.mxu0 0
    %885 = vmatpush1.bf16.msra.mxu0 0
    %886 = vmatprep.subr.bf16.mxu0 0
    %887 = vmatpush1.bf16.msra.mxu0 0
    %888 = vmatprep.mubr.bf16.mxu0 0
    %889 = vmatmul.mubr.bf16.gmra.mrb[0].mxu0 %v791
    %v890 = vpop.f32.mrb[0].mxu0
    %v891 = vadd.f32 %v60, %v890
    %v892 = vpop.f32.mrb[0].mxu0
    %v893 = vpop.f32.mrb[0].mxu0
    %v894 = vpop.f32.mrb[0].mxu0
    %895 = vdwg.mxu0
    %896 = vst [vmem:[%s8] sm:$0x3] %v891
    %v897 = vmul.f32 %v891, 0.5
    %v898 = vmul.f32 %v897, 1.442695
    %v899 = vpow.pop %v898
    %v900 = vld [vmem:[%s1] sm:$0x3]
    %902 = vrot.lane.b32.xlu0 %v900, 32
    %v903 = vpop.permute.xlu0 %902
    %v905 = vmul.f32 %v899, %v903
    %907 = vrot.lane.b32.xlu0 %v905, 96
    %v908 = vpop.permute.xlu0 %907
    %v910 = vadd.f32 %v891, %v908
    %v911 = vpack.c.bf16 %v910, %v910
    %v912 = vld [vmem:[%s4] sm:$0xf]
    %v913 = vld [vmem:[%s4 + $0x4] sm:$0xf]
    %v914 = vld [vmem:[%s4 + $0x8] sm:$0xf]
    %v915 = vld [vmem:[%s4 + $0xc] sm:$0xf]
    %v920 = vunpack.c.l.b16 %v912
    %v921 = vunpack.c.l.b16 %v913
    %v922 = vunpack.c.l.b16 %v914
    %v923 = vunpack.c.l.b16 %v915
    %v924 = vpack.c.b16 %v921, %v920
    %v925 = vpack.c.b16 %v923, %v922
    %vm928 = vcmask 261120
    %v930 = vsel %vm928, %v911, 0
    %932 = vmatprep.subr.bf16.mxu0 0
    %933 = vmatpush1.bf16.msra.mxu0 %v924
    %934 = vmatprep.subr.bf16.mxu0 0
    %935 = vmatpush1.bf16.msra.mxu0 %v925
    %936 = vmatprep.subr.bf16.mxu0 0
    %937 = vmatpush1.bf16.msra.mxu0 0
    %938 = vmatprep.subr.bf16.mxu0 0
    %939 = vmatpush1.bf16.msra.mxu0 0
    %940 = vmatprep.subr.bf16.mxu0 0
    %941 = vmatpush1.bf16.msra.mxu0 0
    %942 = vmatprep.subr.bf16.mxu0 0
    %943 = vmatpush1.bf16.msra.mxu0 0
    %944 = vmatprep.subr.bf16.mxu0 0
    %945 = vmatpush1.bf16.msra.mxu0 0
    %946 = vmatprep.subr.bf16.mxu0 0
    %947 = vmatpush1.bf16.msra.mxu0 0
    %948 = vmatprep.subr.bf16.mxu0 0
    %949 = vmatpush1.bf16.msra.mxu0 0
    %950 = vmatprep.subr.bf16.mxu0 0
    %951 = vmatpush1.bf16.msra.mxu0 0
    %952 = vmatprep.subr.bf16.mxu0 0
    %953 = vmatpush1.bf16.msra.mxu0 0
    %954 = vmatprep.subr.bf16.mxu0 0
    %955 = vmatpush1.bf16.msra.mxu0 0
    %956 = vmatprep.subr.bf16.mxu0 0
    %957 = vmatpush1.bf16.msra.mxu0 0
    %958 = vmatprep.subr.bf16.mxu0 0
    %959 = vmatpush1.bf16.msra.mxu0 0
    %960 = vmatprep.subr.bf16.mxu0 0
    %961 = vmatpush1.bf16.msra.mxu0 0
    %962 = vmatprep.subr.bf16.mxu0 0
    %963 = vmatpush1.bf16.msra.mxu0 0
    %964 = vmatprep.mubr.bf16.mxu0 0
    %965 = vmatmul.mubr.bf16.gmra.mrb[0].mxu0 %v930
    %v966 = vpop.f32.mrb[0].mxu0
    %v967 = vadd.f32 %v61, %v966
    %v968 = vpop.f32.mrb[0].mxu0
    %v969 = vpop.f32.mrb[0].mxu0
    %v970 = vpop.f32.mrb[0].mxu0
    %971 = vdwg.mxu0
    %v972 = vmax.f32 %v967, 0.0
    %v973 = vpack.c.bf16 %v972, %v972
    %v974 = vld [vmem:[#allocation4] sm:$0xff]
    %v975 = vld [vmem:[#allocation4 + $0x8] sm:$0xff]
    %v976 = vld [vmem:[#allocation4 + $0x10] sm:$0xff]
    %v977 = vld [vmem:[#allocation4 + $0x18] sm:$0xff]
    %v978 = vld [vmem:[#allocation4 + $0x20] sm:$0xff]
    %v979 = vld [vmem:[#allocation4 + $0x28] sm:$0xff]
    %v980 = vld [vmem:[#allocation4 + $0x30] sm:$0xff]
    %v981 = vld [vmem:[#allocation4 + $0x38] sm:$0xff]
    %v982 = vld [vmem:[#allocation4 + $0x40] sm:$0xff]
    %v983 = vld [vmem:[#allocation4 + $0x48] sm:$0xff]
    %v984 = vld [vmem:[#allocation4 + $0x50] sm:$0xff]
    %v985 = vld [vmem:[#allocation4 + $0x58] sm:$0xff]
    %v986 = vld [vmem:[#allocation4 + $0x60] sm:$0xff]
    %v987 = vld [vmem:[#allocation4 + $0x68] sm:$0xff]
    %v988 = vld [vmem:[#allocation4 + $0x70] sm:$0xff]
    %v989 = vld [vmem:[#allocation4 + $0x78] sm:$0xff]
    %v990 = vld [vmem:[#allocation4 + $0x80] sm:$0xff]
    %v991 = vld [vmem:[#allocation4 + $0x88] sm:$0xff]
    %v992 = vld [vmem:[#allocation4 + $0x90] sm:$0xff]
    %v993 = vld [vmem:[#allocation4 + $0x98] sm:$0xff]
    %v994 = vld [vmem:[#allocation4 + $0xa0] sm:$0xff]
    %v995 = vld [vmem:[#allocation4 + $0xa8] sm:$0xff]
    %v996 = vld [vmem:[#allocation4 + $0xb0] sm:$0xff]
    %v997 = vld [vmem:[#allocation4 + $0xb8] sm:$0xff]
    %v998 = vld [vmem:[#allocation4 + $0xc0] sm:$0xff]
    %v999 = vld [vmem:[#allocation4 + $0xc8] sm:$0xff]
    %v1000 = vld [vmem:[#allocation4 + $0xd0] sm:$0xff]
    %v1001 = vld [vmem:[#allocation4 + $0xd8] sm:$0xff]
    %v1002 = vld [vmem:[#allocation4 + $0xe0] sm:$0xff]
    %v1003 = vld [vmem:[#allocation4 + $0xe8] sm:$0xff]
    %v1004 = vld [vmem:[#allocation4 + $0xf0] sm:$0xff]
    %v1005 = vld [vmem:[#allocation4 + $0xf8] sm:$0xff]
    %v1006 = vld [vmem:[#allocation4 + $0x100] sm:$0xff]
    %v1007 = vld [vmem:[#allocation4 + $0x108] sm:$0xff]
    %v1008 = vld [vmem:[#allocation4 + $0x110] sm:$0xff]
    %v1009 = vld [vmem:[#allocation4 + $0x118] sm:$0xff]
    %v1010 = vld [vmem:[#allocation4 + $0x120] sm:$0xff]
    %v1011 = vld [vmem:[#allocation4 + $0x128] sm:$0xff]
    %v1012 = vld [vmem:[#allocation4 + $0x130] sm:$0xff]
    %v1013 = vld [vmem:[#allocation4 + $0x138] sm:$0xff]
    %v1014 = vld [vmem:[#allocation4 + $0x140] sm:$0xff]
    %v1015 = vld [vmem:[#allocation4 + $0x148] sm:$0xff]
    %v1016 = vld [vmem:[#allocation4 + $0x150] sm:$0xff]
    %v1017 = vld [vmem:[#allocation4 + $0x158] sm:$0xff]
    %v1018 = vld [vmem:[#allocation4 + $0x160] sm:$0xff]
    %v1019 = vld [vmem:[#allocation4 + $0x168] sm:$0xff]
    %v1020 = vld [vmem:[#allocation4 + $0x170] sm:$0xff]
    %v1021 = vld [vmem:[#allocation4 + $0x178] sm:$0xff]
    %v1022 = vld [vmem:[#allocation4 + $0x180] sm:$0xff]
    %v1023 = vld [vmem:[#allocation4 + $0x188] sm:$0xff]
    %v1024 = vld [vmem:[#allocation4 + $0x190] sm:$0xff]
    %v1025 = vld [vmem:[#allocation4 + $0x198] sm:$0xff]
    %v1026 = vld [vmem:[#allocation4 + $0x1a0] sm:$0xff]
    %v1027 = vld [vmem:[#allocation4 + $0x1a8] sm:$0xff]
    %v1028 = vld [vmem:[#allocation4 + $0x1b0] sm:$0xff]
    %v1029 = vld [vmem:[#allocation4 + $0x1b8] sm:$0xff]
    %v1030 = vld [vmem:[#allocation4 + $0x1c0] sm:$0xff]
    %v1031 = vld [vmem:[#allocation4 + $0x1c8] sm:$0xff]
    %v1032 = vld [vmem:[#allocation4 + $0x1d0] sm:$0xff]
    %v1033 = vld [vmem:[#allocation4 + $0x1d8] sm:$0xff]
    %v1034 = vld [vmem:[#allocation4 + $0x1e0] sm:$0xff]
    %v1035 = vld [vmem:[#allocation4 + $0x1e8] sm:$0xff]
    %v1036 = vld [vmem:[#allocation4 + $0x1f0] sm:$0xff]
    %v1037 = vld [vmem:[#allocation4 + $0x1f8] sm:$0xff]
    %v1039 = vlaneseq
    %v1040 = vshrl.u32 %v1039, 7
    %v1041 = vsub.s32 0, %v1040
    %v1042 = vrot.slane %v65, %v1041
    %v1043 = vlaneseq
    %v1044 = vshrl.u32 %v1043, 7
    %v1045 = vsub.s32 1, %v1044
    %v1046 = vrot.slane %v65, %v1045
    %v1047 = vlaneseq
    %v1048 = vshrl.u32 %v1047, 7
    %v1049 = vsub.s32 2, %v1048
    %v1050 = vrot.slane %v65, %v1049
    %v1051 = vlaneseq
    %v1052 = vshrl.u32 %v1051, 7
    %v1053 = vsub.s32 3, %v1052
    %v1054 = vrot.slane %v65, %v1053
    %v1055 = vlaneseq
    %v1056 = vshrl.u32 %v1055, 7
    %v1057 = vsub.s32 4, %v1056
    %v1058 = vrot.slane %v65, %v1057
    %v1059 = vlaneseq
    %v1060 = vshrl.u32 %v1059, 7
    %v1061 = vsub.s32 5, %v1060
    %v1062 = vrot.slane %v65, %v1061
    %v1063 = vlaneseq
    %v1064 = vshrl.u32 %v1063, 7
    %v1065 = vsub.s32 6, %v1064
    %v1066 = vrot.slane %v65, %v1065
    %v1067 = vlaneseq
    %v1068 = vshrl.u32 %v1067, 7
    %v1069 = vsub.s32 7, %v1068
    %v1070 = vrot.slane %v65, %v1069
    %v1143 = vunpack.c.l.b16 %v974
    %v1144 = vunpack.c.h.b16 %v974
    %v1145 = vunpack.c.l.b16 %v975
    %v1146 = vunpack.c.h.b16 %v975
    %v1147 = vunpack.c.l.b16 %v976
    %v1148 = vunpack.c.h.b16 %v976
    %v1149 = vunpack.c.l.b16 %v977
    %v1150 = vunpack.c.h.b16 %v977
    %v1151 = vunpack.c.l.b16 %v978
    %v1152 = vunpack.c.h.b16 %v978
    %v1153 = vunpack.c.l.b16 %v979
    %v1154 = vunpack.c.h.b16 %v979
    %v1155 = vunpack.c.l.b16 %v980
    %v1156 = vunpack.c.h.b16 %v980
    %v1157 = vunpack.c.l.b16 %v981
    %v1158 = vunpack.c.h.b16 %v981
    %v1159 = vunpack.c.l.b16 %v982
    %v1160 = vunpack.c.h.b16 %v982
    %v1161 = vunpack.c.l.b16 %v983
    %v1162 = vunpack.c.h.b16 %v983
    %v1163 = vunpack.c.l.b16 %v984
    %v1164 = vunpack.c.h.b16 %v984
    %v1165 = vunpack.c.l.b16 %v985
    %v1166 = vunpack.c.h.b16 %v985
    %v1167 = vunpack.c.l.b16 %v986
    %v1168 = vunpack.c.h.b16 %v986
    %v1169 = vunpack.c.l.b16 %v987
    %v1170 = vunpack.c.h.b16 %v987
    %v1171 = vunpack.c.l.b16 %v988
    %v1172 = vunpack.c.h.b16 %v988
    %v1173 = vunpack.c.l.b16 %v989
    %v1174 = vunpack.c.h.b16 %v989
    %v1175 = vunpack.c.l.b16 %v990
    %v1176 = vunpack.c.h.b16 %v990
    %v1177 = vunpack.c.l.b16 %v991
    %v1178 = vunpack.c.h.b16 %v991
    %v1179 = vunpack.c.l.b16 %v992
    %v1180 = vunpack.c.h.b16 %v992
    %v1181 = vunpack.c.l.b16 %v993
    %v1182 = vunpack.c.h.b16 %v993
    %v1183 = vunpack.c.l.b16 %v994
    %v1184 = vunpack.c.h.b16 %v994
    %v1185 = vunpack.c.l.b16 %v995
    %v1186 = vunpack.c.h.b16 %v995
    %v1187 = vunpack.c.l.b16 %v996
    %v1188 = vunpack.c.h.b16 %v996
    %v1189 = vunpack.c.l.b16 %v997
    %v1190 = vunpack.c.h.b16 %v997
    %v1191 = vunpack.c.l.b16 %v998
    %v1192 = vunpack.c.h.b16 %v998
    %v1193 = vunpack.c.l.b16 %v999
    %v1194 = vunpack.c.h.b16 %v999
    %v1195 = vunpack.c.l.b16 %v1000
    %v1196 = vunpack.c.h.b16 %v1000
    %v1197 = vunpack.c.l.b16 %v1001
    %v1198 = vunpack.c.h.b16 %v1001
    %v1199 = vunpack.c.l.b16 %v1002
    %v1200 = vunpack.c.h.b16 %v1002
    %v1201 = vunpack.c.l.b16 %v1003
    %v1202 = vunpack.c.h.b16 %v1003
    %v1203 = vunpack.c.l.b16 %v1004
    %v1204 = vunpack.c.h.b16 %v1004
    %v1205 = vunpack.c.l.b16 %v1005
    %v1206 = vunpack.c.h.b16 %v1005
    %v1207 = vunpack.c.l.b16 %v1006
    %v1208 = vunpack.c.h.b16 %v1006
    %v1209 = vunpack.c.l.b16 %v1007
    %v1210 = vunpack.c.h.b16 %v1007
    %v1211 = vunpack.c.l.b16 %v1008
    %v1212 = vunpack.c.h.b16 %v1008
    %v1213 = vunpack.c.l.b16 %v1009
    %v1214 = vunpack.c.h.b16 %v1009
    %v1215 = vunpack.c.l.b16 %v1010
    %v1216 = vunpack.c.h.b16 %v1010
    %v1217 = vunpack.c.l.b16 %v1011
    %v1218 = vunpack.c.h.b16 %v1011
    %v1219 = vunpack.c.l.b16 %v1012
    %v1220 = vunpack.c.h.b16 %v1012
    %v1221 = vunpack.c.l.b16 %v1013
    %v1222 = vunpack.c.h.b16 %v1013
    %v1223 = vunpack.c.l.b16 %v1014
    %v1224 = vunpack.c.h.b16 %v1014
    %v1225 = vunpack.c.l.b16 %v1015
    %v1226 = vunpack.c.h.b16 %v1015
    %v1227 = vunpack.c.l.b16 %v1016
    %v1228 = vunpack.c.h.b16 %v1016
    %v1229 = vunpack.c.l.b16 %v1017
    %v1230 = vunpack.c.h.b16 %v1017
    %v1231 = vunpack.c.l.b16 %v1018
    %v1232 = vunpack.c.h.b16 %v1018
    %v1233 = vunpack.c.l.b16 %v1019
    %v1234 = vunpack.c.h.b16 %v1019
    %v1235 = vunpack.c.l.b16 %v1020
    %v1236 = vunpack.c.h.b16 %v1020
    %v1237 = vunpack.c.l.b16 %v1021
    %v1238 = vunpack.c.h.b16 %v1021
    %v1239 = vunpack.c.l.b16 %v1022
    %v1240 = vunpack.c.h.b16 %v1022
    %v1241 = vunpack.c.l.b16 %v1023
    %v1242 = vunpack.c.h.b16 %v1023
    %v1243 = vunpack.c.l.b16 %v1024
    %v1244 = vunpack.c.h.b16 %v1024
    %v1245 = vunpack.c.l.b16 %v1025
    %v1246 = vunpack.c.h.b16 %v1025
    %v1247 = vunpack.c.l.b16 %v1026
    %v1248 = vunpack.c.h.b16 %v1026
    %v1249 = vunpack.c.l.b16 %v1027
    %v1250 = vunpack.c.h.b16 %v1027
    %v1251 = vunpack.c.l.b16 %v1028
    %v1252 = vunpack.c.h.b16 %v1028
    %v1253 = vunpack.c.l.b16 %v1029
    %v1254 = vunpack.c.h.b16 %v1029
    %v1255 = vunpack.c.l.b16 %v1030
    %v1256 = vunpack.c.h.b16 %v1030
    %v1257 = vunpack.c.l.b16 %v1031
    %v1258 = vunpack.c.h.b16 %v1031
    %v1259 = vunpack.c.l.b16 %v1032
    %v1260 = vunpack.c.h.b16 %v1032
    %v1261 = vunpack.c.l.b16 %v1033
    %v1262 = vunpack.c.h.b16 %v1033
    %v1263 = vunpack.c.l.b16 %v1034
    %v1264 = vunpack.c.h.b16 %v1034
    %v1265 = vunpack.c.l.b16 %v1035
    %v1266 = vunpack.c.h.b16 %v1035
    %v1267 = vunpack.c.l.b16 %v1036
    %v1268 = vunpack.c.h.b16 %v1036
    %v1269 = vunpack.c.l.b16 %v1037
    %v1270 = vunpack.c.h.b16 %v1037
    %v1271 = vpack.c.b16 %v1151, %v1143
    %v1272 = vpack.c.b16 %v1152, %v1144
    %v1273 = vpack.c.b16 %v1153, %v1145
    %v1274 = vpack.c.b16 %v1154, %v1146
    %v1275 = vpack.c.b16 %v1155, %v1147
    %v1276 = vpack.c.b16 %v1156, %v1148
    %v1277 = vpack.c.b16 %v1157, %v1149
    %v1278 = vpack.c.b16 %v1158, %v1150
    %v1279 = vpack.c.b16 %v1167, %v1159
    %v1280 = vpack.c.b16 %v1168, %v1160
    %v1281 = vpack.c.b16 %v1169, %v1161
    %v1282 = vpack.c.b16 %v1170, %v1162
    %v1283 = vpack.c.b16 %v1171, %v1163
    %v1284 = vpack.c.b16 %v1172, %v1164
    %v1285 = vpack.c.b16 %v1173, %v1165
    %v1286 = vpack.c.b16 %v1174, %v1166
    %v1287 = vpack.c.b16 %v1183, %v1175
    %v1288 = vpack.c.b16 %v1184, %v1176
    %v1289 = vpack.c.b16 %v1185, %v1177
    %v1290 = vpack.c.b16 %v1186, %v1178
    %v1291 = vpack.c.b16 %v1187, %v1179
    %v1292 = vpack.c.b16 %v1188, %v1180
    %v1293 = vpack.c.b16 %v1189, %v1181
    %v1294 = vpack.c.b16 %v1190, %v1182
    %v1295 = vpack.c.b16 %v1199, %v1191
    %v1296 = vpack.c.b16 %v1200, %v1192
    %v1297 = vpack.c.b16 %v1201, %v1193
    %v1298 = vpack.c.b16 %v1202, %v1194
    %v1299 = vpack.c.b16 %v1203, %v1195
    %v1300 = vpack.c.b16 %v1204, %v1196
    %v1301 = vpack.c.b16 %v1205, %v1197
    %v1302 = vpack.c.b16 %v1206, %v1198
    %v1303 = vpack.c.b16 %v1215, %v1207
    %v1304 = vpack.c.b16 %v1216, %v1208
    %v1305 = vpack.c.b16 %v1217, %v1209
    %v1306 = vpack.c.b16 %v1218, %v1210
    %v1307 = vpack.c.b16 %v1219, %v1211
    %v1308 = vpack.c.b16 %v1220, %v1212
    %v1309 = vpack.c.b16 %v1221, %v1213
    %v1310 = vpack.c.b16 %v1222, %v1214
    %v1311 = vpack.c.b16 %v1231, %v1223
    %v1312 = vpack.c.b16 %v1232, %v1224
    %v1313 = vpack.c.b16 %v1233, %v1225
    %v1314 = vpack.c.b16 %v1234, %v1226
    %v1315 = vpack.c.b16 %v1235, %v1227
    %v1316 = vpack.c.b16 %v1236, %v1228
    %v1317 = vpack.c.b16 %v1237, %v1229
    %v1318 = vpack.c.b16 %v1238, %v1230
    %v1319 = vpack.c.b16 %v1247, %v1239
    %v1320 = vpack.c.b16 %v1248, %v1240
    %v1321 = vpack.c.b16 %v1249, %v1241
    %v1322 = vpack.c.b16 %v1250, %v1242
    %v1323 = vpack.c.b16 %v1251, %v1243
    %v1324 = vpack.c.b16 %v1252, %v1244
    %v1325 = vpack.c.b16 %v1253, %v1245
    %v1326 = vpack.c.b16 %v1254, %v1246
    %v1327 = vpack.c.b16 %v1263, %v1255
    %v1328 = vpack.c.b16 %v1264, %v1256
    %v1329 = vpack.c.b16 %v1265, %v1257
    %v1330 = vpack.c.b16 %v1266, %v1258
    %v1331 = vpack.c.b16 %v1267, %v1259
    %v1332 = vpack.c.b16 %v1268, %v1260
    %v1333 = vpack.c.b16 %v1269, %v1261
    %v1334 = vpack.c.b16 %v1270, %v1262
    %1399 = vmatprep.subr.bf16.mxu0 %v1272
    %1400 = vmatpush1.bf16.msra.mxu0 %v1271
    %1401 = vmatprep.subr.bf16.mxu0 %v1280
    %1402 = vmatpush1.bf16.msra.mxu0 %v1279
    %1403 = vmatprep.subr.bf16.mxu0 %v1288
    %1404 = vmatpush1.bf16.msra.mxu0 %v1287
    %1405 = vmatprep.subr.bf16.mxu0 %v1296
    %1406 = vmatpush1.bf16.msra.mxu0 %v1295
    %1407 = vmatprep.subr.bf16.mxu0 %v1304
    %1408 = vmatpush1.bf16.msra.mxu0 %v1303
    %1409 = vmatprep.subr.bf16.mxu0 %v1312
    %1410 = vmatpush1.bf16.msra.mxu0 %v1311
    %1411 = vmatprep.subr.bf16.mxu0 %v1320
    %1412 = vmatpush1.bf16.msra.mxu0 %v1319
    %1413 = vmatprep.subr.bf16.mxu0 %v1328
    %1414 = vmatpush1.bf16.msra.mxu0 %v1327
    %1415 = vmatprep.subr.bf16.mxu0 0
    %1416 = vmatpush1.bf16.msra.mxu0 0
    %1417 = vmatprep.subr.bf16.mxu0 0
    %1418 = vmatpush1.bf16.msra.mxu0 0
    %1419 = vmatprep.subr.bf16.mxu0 0
    %1420 = vmatpush1.bf16.msra.mxu0 0
    %1421 = vmatprep.subr.bf16.mxu0 0
    %1422 = vmatpush1.bf16.msra.mxu0 0
    %1423 = vmatprep.subr.bf16.mxu0 0
    %1424 = vmatpush1.bf16.msra.mxu0 0
    %1425 = vmatprep.subr.bf16.mxu0 0
    %1426 = vmatpush1.bf16.msra.mxu0 0
    %1427 = vmatprep.subr.bf16.mxu0 0
    %1428 = vmatpush1.bf16.msra.mxu0 0
    %1429 = vmatprep.subr.bf16.mxu0 0
    %1430 = vmatpush1.bf16.msra.mxu0 0
    %1431 = vmatprep.mubr.bf16.mxu0 0
    %1432 = vmatmul.mubr.bf16.gmra.mrb[0].mxu0 %v973
    %v1433 = vpop.f32.mrb[0].mxu0
    %v1434 = vadd.f32 %v1042, %v1433
    %v1435 = vpop.f32.mrb[0].mxu0
    %v1436 = vadd.f32 %v1046, %v1435
    %v1437 = vpop.f32.mrb[0].mxu0
    %v1438 = vpop.f32.mrb[0].mxu0
    %1439 = vdwg.mxu0
    %1440 = vmatprep.subr.bf16.mxu0 %v1274
    %1441 = vmatpush1.bf16.msra.mxu0 %v1273
    %1442 = vmatprep.subr.bf16.mxu0 %v1282
    %1443 = vmatpush1.bf16.msra.mxu0 %v1281
    %1444 = vmatprep.subr.bf16.mxu0 %v1290
    %1445 = vmatpush1.bf16.msra.mxu0 %v1289
    %1446 = vmatprep.subr.bf16.mxu0 %v1298
    %1447 = vmatpush1.bf16.msra.mxu0 %v1297
    %1448 = vmatprep.subr.bf16.mxu0 %v1306
    %1449 = vmatpush1.bf16.msra.mxu0 %v1305
    %1450 = vmatprep.subr.bf16.mxu0 %v1314
    %1451 = vmatpush1.bf16.msra.mxu0 %v1313
    %1452 = vmatprep.subr.bf16.mxu0 %v1322
    %1453 = vmatpush1.bf16.msra.mxu0 %v1321
    %1454 = vmatprep.subr.bf16.mxu0 %v1330
    %1455 = vmatpush1.bf16.msra.mxu0 %v1329
    %1456 = vmatprep.subr.bf16.mxu0 0
    %1457 = vmatpush1.bf16.msra.mxu0 0
    %1458 = vmatprep.subr.bf16.mxu0 0
    %1459 = vmatpush1.bf16.msra.mxu0 0
    %1460 = vmatprep.subr.bf16.mxu0 0
    %1461 = vmatpush1.bf16.msra.mxu0 0
    %1462 = vmatprep.subr.bf16.mxu0 0
    %1463 = vmatpush1.bf16.msra.mxu0 0
    %1464 = vmatprep.subr.bf16.mxu0 0
    %1465 = vmatpush1.bf16.msra.mxu0 0
    %1466 = vmatprep.subr.bf16.mxu0 0
    %1467 = vmatpush1.bf16.msra.mxu0 0
    %1468 = vmatprep.subr.bf16.mxu0 0
    %1469 = vmatpush1.bf16.msra.mxu0 0
    %1470 = vmatprep.subr.bf16.mxu0 0
    %1471 = vmatpush1.bf16.msra.mxu0 0
    %1472 = vmatprep.mubr.bf16.mxu0 0
    %1473 = vmatmul.mubr.bf16.gmra.mrb[0].mxu0 %v973
    %v1474 = vpop.f32.mrb[0].mxu0
    %v1475 = vadd.f32 %v1050, %v1474
    %v1476 = vpop.f32.mrb[0].mxu0
    %v1477 = vadd.f32 %v1054, %v1476
    %v1478 = vpop.f32.mrb[0].mxu0
    %v1479 = vpop.f32.mrb[0].mxu0
    %1480 = vdwg.mxu0
    %1481 = vmatprep.subr.bf16.mxu0 %v1276
    %1482 = vmatpush1.bf16.msra.mxu0 %v1275
    %1483 = vmatprep.subr.bf16.mxu0 %v1284
    %1484 = vmatpush1.bf16.msra.mxu0 %v1283
    %1485 = vmatprep.subr.bf16.mxu0 %v1292
    %1486 = vmatpush1.bf16.msra.mxu0 %v1291
    %1487 = vmatprep.subr.bf16.mxu0 %v1300
    %1488 = vmatpush1.bf16.msra.mxu0 %v1299
    %1489 = vmatprep.subr.bf16.mxu0 %v1308
    %1490 = vmatpush1.bf16.msra.mxu0 %v1307
    %1491 = vmatprep.subr.bf16.mxu0 %v1316
    %1492 = vmatpush1.bf16.msra.mxu0 %v1315
    %1493 = vmatprep.subr.bf16.mxu0 %v1324
    %1494 = vmatpush1.bf16.msra.mxu0 %v1323
    %1495 = vmatprep.subr.bf16.mxu0 %v1332
    %1496 = vmatpush1.bf16.msra.mxu0 %v1331
    %1497 = vmatprep.subr.bf16.mxu0 0
    %1498 = vmatpush1.bf16.msra.mxu0 0
    %1499 = vmatprep.subr.bf16.mxu0 0
    %1500 = vmatpush1.bf16.msra.mxu0 0
    %1501 = vmatprep.subr.bf16.mxu0 0
    %1502 = vmatpush1.bf16.msra.mxu0 0
    %1503 = vmatprep.subr.bf16.mxu0 0
    %1504 = vmatpush1.bf16.msra.mxu0 0
    %1505 = vmatprep.subr.bf16.mxu0 0
    %1506 = vmatpush1.bf16.msra.mxu0 0
    %1507 = vmatprep.subr.bf16.mxu0 0
    %1508 = vmatpush1.bf16.msra.mxu0 0
    %1509 = vmatprep.subr.bf16.mxu0 0
    %1510 = vmatpush1.bf16.msra.mxu0 0
    %1511 = vmatprep.subr.bf16.mxu0 0
    %1512 = vmatpush1.bf16.msra.mxu0 0
    %1513 = vmatprep.mubr.bf16.mxu0 0
    %1514 = vmatmul.mubr.bf16.gmra.mrb[0].mxu0 %v973
    %v1515 = vpop.f32.mrb[0].mxu0
    %v1516 = vadd.f32 %v1058, %v1515
    %v1517 = vpop.f32.mrb[0].mxu0
    %v1518 = vadd.f32 %v1062, %v1517
    %v1519 = vpop.f32.mrb[0].mxu0
    %v1520 = vpop.f32.mrb[0].mxu0
    %1521 = vdwg.mxu0
    %1522 = vmatprep.subr.bf16.mxu0 %v1278
    %1523 = vmatpush1.bf16.msra.mxu0 %v1277
    %1524 = vmatprep.subr.bf16.mxu0 %v1286
    %1525 = vmatpush1.bf16.msra.mxu0 %v1285
    %1526 = vmatprep.subr.bf16.mxu0 %v1294
    %1527 = vmatpush1.bf16.msra.mxu0 %v1293
    %1528 = vmatprep.subr.bf16.mxu0 %v1302
    %1529 = vmatpush1.bf16.msra.mxu0 %v1301
    %1530 = vmatprep.subr.bf16.mxu0 %v1310
    %1531 = vmatpush1.bf16.msra.mxu0 %v1309
    %1532 = vmatprep.subr.bf16.mxu0 %v1318
    %1533 = vmatpush1.bf16.msra.mxu0 %v1317
    %1534 = vmatprep.subr.bf16.mxu0 %v1326
    %1535 = vmatpush1.bf16.msra.mxu0 %v1325
    %1536 = vmatprep.subr.bf16.mxu0 %v1334
    %1537 = vmatpush1.bf16.msra.mxu0 %v1333
    %1538 = vmatprep.subr.bf16.mxu0 0
    %1539 = vmatpush1.bf16.msra.mxu0 0
    %1540 = vmatprep.subr.bf16.mxu0 0
    %1541 = vmatpush1.bf16.msra.mxu0 0
    %1542 = vmatprep.subr.bf16.mxu0 0
    %1543 = vmatpush1.bf16.msra.mxu0 0
    %1544 = vmatprep.subr.bf16.mxu0 0
    %1545 = vmatpush1.bf16.msra.mxu0 0
    %1546 = vmatprep.subr.bf16.mxu0 0
    %1547 = vmatpush1.bf16.msra.mxu0 0
    %1548 = vmatprep.subr.bf16.mxu0 0
    %1549 = vmatpush1.bf16.msra.mxu0 0
    %1550 = vmatprep.subr.bf16.mxu0 0
    %1551 = vmatpush1.bf16.msra.mxu0 0
    %1552 = vmatprep.subr.bf16.mxu0 0
    %1553 = vmatpush1.bf16.msra.mxu0 0
    %1554 = vmatprep.mubr.bf16.mxu0 0
    %1555 = vmatmul.mubr.bf16.gmra.mrb[0].mxu0 %v973
    %v1556 = vpop.f32.mrb[0].mxu0
    %v1557 = vadd.f32 %v1066, %v1556
    %v1558 = vpop.f32.mrb[0].mxu0
    %v1559 = vadd.f32 %v1070, %v1558
    %v1560 = vpop.f32.mrb[0].mxu0
    %v1561 = vpop.f32.mrb[0].mxu0
    %1562 = vdwg.mxu0
    %v1563 = vxor.u32 %v1434, 2147483648
    %v1564 = vxor.u32 %v1436, 2147483648
    %v1565 = vxor.u32 %v1475, 2147483648
    %v1566 = vxor.u32 %v1477, 2147483648
    %v1567 = vxor.u32 %v1516, 2147483648
    %v1568 = vxor.u32 %v1518, 2147483648
    %v1569 = vxor.u32 %v1557, 2147483648
    %v1570 = vxor.u32 %v1559, 2147483648
    %v1571 = vmul.f32 %v1563, 1.442695
    %v1572 = vpow.pop %v1571
    %v1573 = vmul.f32 %v1564, 1.442695
    %v1574 = vpow.pop %v1573
    %v1575 = vmul.f32 %v1565, 1.442695
    %v1576 = vpow.pop %v1575
    %v1577 = vmul.f32 %v1566, 1.442695
    %v1578 = vpow.pop %v1577
    %v1579 = vmul.f32 %v1567, 1.442695
    %v1580 = vpow.pop %v1579
    %v1581 = vmul.f32 %v1568, 1.442695
    %v1582 = vpow.pop %v1581
    %v1583 = vmul.f32 %v1569, 1.442695
    %v1584 = vpow.pop %v1583
    %v1585 = vmul.f32 %v1570, 1.442695
    %v1586 = vpow.pop %v1585
    %v1587 = vadd.f32 %v1572, 1.0
    %v1588 = vadd.f32 %v1574, 1.0
    %v1589 = vadd.f32 %v1576, 1.0
    %v1590 = vadd.f32 %v1578, 1.0
    %v1591 = vadd.f32 %v1580, 1.0
    %v1592 = vadd.f32 %v1582, 1.0
    %v1593 = vadd.f32 %v1584, 1.0
    %v1594 = vadd.f32 %v1586, 1.0
    %v1595 = vrcp.pop %v1587
    %v1596 = vmul.f32 1.0, %v1595
    %v1597 = vrcp.pop %v1588
    %v1598 = vmul.f32 1.0, %v1597
    %v1599 = vrcp.pop %v1589
    %v1600 = vmul.f32 1.0, %v1599
    %v1601 = vrcp.pop %v1590
    %v1602 = vmul.f32 1.0, %v1601
    %v1603 = vrcp.pop %v1591
    %v1604 = vmul.f32 1.0, %v1603
    %v1605 = vrcp.pop %v1592
    %v1606 = vmul.f32 1.0, %v1605
    %v1607 = vrcp.pop %v1593
    %v1608 = vmul.f32 1.0, %v1607
    %v1609 = vrcp.pop %v1594
    %v1610 = vmul.f32 1.0, %v1609
    %v1619 = vcombine.low %v1596, %v1598
    %v1620 = vcombine.low %v1600, %v1602
    %v1622 = vunpack.c.l.s4 1983009808
    %v1623 = vunpack.c.0.s8 %v1622
    %v1624 = vlaneseq
    %v1625 = vshrl.u32 %v1624, 7
    %v1626 = vsub.s32 %v1623, %v1625
    %v1627 = vrot.slane %v1619, %v1626
    %v1629 = vunpack.c.l.s4 1983009808
    %v1630 = vunpack.c.0.s8 %v1629
    %v1631 = vlaneseq
    %v1632 = vshrl.u32 %v1631, 7
    %v1633 = vsub.s32 %v1630, %v1632
    %v1634 = vrot.slane %v1620, %v1633
    %v1635 = vcombine.low %v1627, %v1634
    %v1636 = vcombine.low %v1604, %v1606
    %v1637 = vcombine.low %v1608, %v1610
    %v1639 = vunpack.c.l.s4 1983009808
    %v1640 = vunpack.c.0.s8 %v1639
    %v1641 = vlaneseq
    %v1642 = vshrl.u32 %v1641, 7
    %v1643 = vsub.s32 %v1640, %v1642
    %v1644 = vrot.slane %v1636, %v1643
    %v1646 = vunpack.c.l.s4 1983009808
    %v1647 = vunpack.c.0.s8 %v1646
    %v1648 = vlaneseq
    %v1649 = vshrl.u32 %v1648, 7
    %v1650 = vsub.s32 %v1647, %v1649
    %v1651 = vrot.slane %v1637, %v1650
    %v1652 = vcombine.low %v1644, %v1651
    %1655 = vst [vmem:[%s7] sm:$0xff] %v1635
    %1656 = vst [vmem:[%s7 + $0x8] sm:$0xff] %v1652
    %v1657 = vmax.f32 %v1434, 0.0
    %v1658 = vmax.f32 %v1436, 0.0
    %v1659 = vmax.f32 %v1475, 0.0
    %v1660 = vmax.f32 %v1477, 0.0
    %v1661 = vmax.f32 %v1516, 0.0
    %v1662 = vmax.f32 %v1518, 0.0
    %v1663 = vmax.f32 %v1557, 0.0
    %v1664 = vmax.f32 %v1559, 0.0
    %v1665 = vmul.f32 %v1434, %v75
    %v1666 = vmul.f32 %v1436, %v83
    %v1667 = vmul.f32 %v1475, %v82
    %v1668 = vmul.f32 %v1477, %v84
    %v1669 = vmul.f32 %v1516, %v92
    %v1670 = vmul.f32 %v1518, %v100
    %v1671 = vmul.f32 %v1557, %v99
    %v1672 = vmul.f32 %v1559, %v101
    %v1673 = vsub.f32 %v1657, %v1665
    %v1674 = vsub.f32 %v1658, %v1666
    %v1675 = vsub.f32 %v1659, %v1667
    %v1676 = vsub.f32 %v1660, %v1668
    %v1677 = vsub.f32 %v1661, %v1669
    %v1678 = vsub.f32 %v1662, %v1670
    %v1679 = vsub.f32 %v1663, %v1671
    %v1680 = vsub.f32 %v1664, %v1672
    %v1681 = vand.u32 2147483647, %v1434
    %v1682 = vand.u32 2147483647, %v1436
    %v1683 = vand.u32 2147483647, %v1475
    %v1684 = vand.u32 2147483647, %v1477
    %v1685 = vand.u32 2147483647, %v1516
    %v1686 = vand.u32 2147483647, %v1518
    %v1687 = vand.u32 2147483647, %v1557
    %v1688 = vand.u32 2147483647, %v1559
    %v1689 = vsub.f32 0.0, %v1681
    %v1690 = vsub.f32 0.0, %v1682
    %v1691 = vsub.f32 0.0, %v1683
    %v1692 = vsub.f32 0.0, %v1684
    %v1693 = vsub.f32 0.0, %v1685
    %v1694 = vsub.f32 0.0, %v1686
    %v1695 = vsub.f32 0.0, %v1687
    %v1696 = vsub.f32 0.0, %v1688
    %v1697 = vmul.f32 %v1689, 1.442695
    %v1698 = vpow.pop %v1697
    %v1699 = vmul.f32 %v1690, 1.442695
    %v1700 = vpow.pop %v1699
    %v1701 = vmul.f32 %v1691, 1.442695
    %v1702 = vpow.pop %v1701
    %v1703 = vmul.f32 %v1692, 1.442695
    %v1704 = vpow.pop %v1703
    %v1705 = vmul.f32 %v1693, 1.442695
    %v1706 = vpow.pop %v1705
    %v1707 = vmul.f32 %v1694, 1.442695
    %v1708 = vpow.pop %v1707
    %v1709 = vmul.f32 %v1695, 1.442695
    %v1710 = vpow.pop %v1709
    %v1711 = vmul.f32 %v1696, 1.442695
    %v1712 = vpow.pop %v1711
    %v1713 = vadd.f32 %v1698, 1.0
    %v1714 = vadd.f32 %v1700, 1.0
    %v1715 = vadd.f32 %v1702, 1.0
    %v1716 = vadd.f32 %v1704, 1.0
    %v1717 = vadd.f32 %v1706, 1.0
    %v1718 = vadd.f32 %v1708, 1.0
    %v1719 = vadd.f32 %v1710, 1.0
    %v1720 = vadd.f32 %v1712, 1.0
    %v1721 = vlog2.pop %v1713
    %v1722 = vmul.f32 %v1721, 0.6931472
    %v1723 = vlog2.pop %v1714
    %v1724 = vmul.f32 %v1723, 0.6931472
    %v1725 = vlog2.pop %v1715
    %v1726 = vmul.f32 %v1725, 0.6931472
    %v1727 = vlog2.pop %v1716
    %v1728 = vmul.f32 %v1727, 0.6931472
    %v1729 = vlog2.pop %v1717
    %v1730 = vmul.f32 %v1729, 0.6931472
    %v1731 = vlog2.pop %v1718
    %v1732 = vmul.f32 %v1731, 0.6931472
    %v1733 = vlog2.pop %v1719
    %v1734 = vmul.f32 %v1733, 0.6931472
    %v1735 = vlog2.pop %v1720
    %v1736 = vmul.f32 %v1735, 0.6931472
    %v1737 = vadd.f32 %v1673, %v1722
    %v1738 = vadd.f32 %v1674, %v1724
    %v1739 = vadd.f32 %v1675, %v1726
    %v1740 = vadd.f32 %v1676, %v1728
    %v1741 = vadd.f32 %v1677, %v1730
    %v1742 = vadd.f32 %v1678, %v1732
    %v1743 = vadd.f32 %v1679, %v1734
    %v1744 = vadd.f32 %v1680, %v1736
    %v1745 = vadd.f32 %v891, 1.0
    %v1746 = vmul.f32 %v891, %v891
    %1748 = vrot.lane.b32.xlu0 %v1746, 32
    %v1749 = vpop.permute.xlu0 %1748
    %v1751 = vsub.f32 %v1745, %v1749
    %v1752 = vmul.f32 %v899, %v899
    %v1753 = vsub.f32 %v1751, %v1752
    %v1754 = vmul.f32 %v1753, -0.5
    %vm1755 = vcmask 1041408
    %v1756 = vsel %vm1755, %v1737, 0.0
    %v1757 = vsel %vm1755, %v1738, 0.0
    %v1758 = vadd.f32 %v1756, %v1757
    %v1759 = vsel %vm1755, %v1739, 0.0
    %v1760 = vadd.f32 %v1758, %v1759
    %v1761 = vsel %vm1755, %v1740, 0.0
    %v1762 = vadd.f32 %v1760, %v1761
    %v1763 = vsel %vm1755, %v1741, 0.0
    %v1764 = vadd.f32 %v1762, %v1763
    %v1765 = vsel %vm1755, %v1742, 0.0
    %v1766 = vadd.f32 %v1764, %v1765
    %v1767 = vsel %vm1755, %v1743, 0.0
    %v1768 = vadd.f32 %v1766, %v1767
    %v1769 = vsel %vm1755, %v1744, 0.0
    %v1770 = vadd.f32 %v1768, %v1769
    %1771 = vadd.xlane.f32.xlu0 %v1770
    %v1772 = vpop.xlane.xlu0 %1771
    %1774 = vrot.lane.b32.xlu0 %v1754, 96
    %v1775 = vpop.permute.xlu0 %1774
    %vm1777 = vcmask 254976
    %v1778 = vsel %vm1777, %v1775, 0.0
    %1779 = vadd.xlane.f32.xlu0 %v1778
    %v1780 = vpop.xlane.xlu0 %1779
    %v1781 = vadd.f32 %v1772, %v1780
    %v1782 = vsel %vm1755, %v1781, 0.0
    %v1783 = vrot.slane %v1782, 4
    %v1784 = vadd.f32 %v1782, %v1783
    %v1785 = vrot.slane %v1784, 2
    %v1786 = vadd.f32 %v1784, %v1785
    %v1787 = vrot.slane %v1786, 1
    %v1788 = vadd.f32 %v1786, %v1787
    %vm1789 = vcmask 524800
    %1790 = vst.msk [vmem:[%s8] sm:$0x1] %vm1789, %v1788
    // Predicated region
    $region38: #{vae_forward.1} parent=1 // pred_check
      _
    $region39: #{vae_forward.1} parent=1 // pred_check_branch
      %1792 = sbr.rel (0) target = $region41
    $region40: #{vae_forward.1} parent=1 // pred_region
      _
    $region41: #{vae_forward.1} parent=1 // pred_fallthru
      _
    // Predicated region
    $region42: #{vae_forward.1} parent=1 // pred_check
      _
    $region43: #{vae_forward.1} parent=1 // pred_check_branch
      %1794 = sbr.rel (0) target = $region45
    $region44: #{vae_forward.1} parent=1 // pred_region
      _
    $region45: #{vae_forward.1} parent=1 // pred_fallthru
      _
    // Predicated region
    $region46: #{vae_forward.1} parent=1 // pred_check
      _
    $region47: #{vae_forward.1} parent=1 // pred_check_branch
      %1796 = sbr.rel (0) target = $region49
    $region48: #{vae_forward.1} parent=1 // pred_region
      _
    $region49: #{vae_forward.1} parent=1 // pred_fallthru
      _
    // Predicated region
    $region50: #{vae_forward.1} parent=1 // pred_check
      _
    $region51: #{vae_forward.1} parent=1 // pred_check_branch
      %1798 = sbr.rel (0) target = $region53
    $region52: #{vae_forward.1} parent=1 // pred_region
      _
    $region53: #{vae_forward.1} parent=1 // pred_fallthru
      _
    %1799 = vsyncpa [#allocation3], 1
    %1800 = vsyncpa [#allocation5], 1

</llo_original>
